<compile_context>
chip_gen: v5e
topology: v5e:2x2
jax: 0.10.0
libtpu: 0.0.40
codegen_flags: <defaults>
</compile_context>

<pallas_src>
import jax
import jax.numpy as jnp
from jax.experimental import pallas as pl
from jax.experimental.pallas import tpu as pltpu


_LANE = 128
_PARALLEL = pltpu.CompilerParams(dimension_semantics=("parallel",))


# ---------------------------------------------------------------------------
# Small helpers (glue)
# ---------------------------------------------------------------------------
def _pad_cols(a, lane=_LANE):
    """Zero-pad the last dim of a 2-D array up to a multiple of `lane`."""
    return jnp.pad(a, ((0, 0), (0, (-a.shape[1]) % lane)))


def _tile_m(m, block_m):
    """Pick an M tile.  block_m is a multiple of 8; Pallas masks the ragged
    last block, so we never emit a single giant full-array block."""
    if m <= block_m:
        return m, 1                      # small: one full-dimension block
    return block_m, pl.cdiv(m, block_m)  # ragged last block handled by Pallas


# ---------------------------------------------------------------------------
# Pallas kernels
# ---------------------------------------------------------------------------
def _conv_pool_kernel(p_ref, w_ref, b_ref, o_ref):
    """Fused conv-as-matmul + bias + ReLU + 2x2 max-pool.

    p_ref block: (4, tm, K) -- quadrant q = 2*di+dj holds the im2col rows of
    the conv-output pixels (2*oh+di, 2*ow+dj) for each pooled pixel (oh, ow).
    Pooling is the elementwise max of the four per-quadrant matmul results;
    ReLU commutes with max, so it is applied once at the end.
    """
    w = w_ref[...]
    b = b_ref[...]
    y = jnp.dot(p_ref[0], w, preferred_element_type=jnp.float32) + b
    for q in range(1, 4):
        yq = jnp.dot(p_ref[q], w, preferred_element_type=jnp.float32) + b
        y = jnp.maximum(y, yq)
    o_ref[...] = jnp.maximum(y, 0.0)


def _fc_stack_kernel(x_ref, w3_ref, b3_ref, w4_ref, b4_ref, w5_ref, b5_ref,
                     o_ref):
    # Fused fc3 -> ReLU -> fc4 -> ReLU -> fc5, everything VMEM resident.
    h = jnp.dot(x_ref[...], w3_ref[...], preferred_element_type=jnp.float32)
    h = jnp.maximum(h + b3_ref[...], 0.0)
    h = jnp.dot(h, w4_ref[...], preferred_element_type=jnp.float32)
    h = jnp.maximum(h + b4_ref[...], 0.0)
    y = jnp.dot(h, w5_ref[...], preferred_element_type=jnp.float32)
    o_ref[...] = y + b5_ref[...]


# ---------------------------------------------------------------------------
# Pallas wrappers
# ---------------------------------------------------------------------------
def pallas_conv_pool(patches, wp, bp, *, block_m=1024):
    """Fused relu(conv)+maxpool2x2.  patches:(4, M, K), wp:(K, Np), bp:(1, Np),
    Np % 128 == 0.  Output (M, Np): pooled rows in (b, oh, ow) order."""
    _, m, k = patches.shape
    kw, np_ = wp.shape
    assert k == kw, (k, kw)
    tm, n_blocks = _tile_m(m, block_m)
    return pl.pallas_call(
        _conv_pool_kernel,
        out_shape=jax.ShapeDtypeStruct((m, np_), jnp.float32),
        grid=(n_blocks,),
        in_specs=[
            pl.BlockSpec((4, tm, k), lambda i: (0, i, 0)),
            pl.BlockSpec((k, np_), lambda i: (0, 0)),
            pl.BlockSpec((1, np_), lambda i: (0, 0)),
        ],
        out_specs=pl.BlockSpec((tm, np_), lambda i: (i, 0)),
        compiler_params=_PARALLEL,
    )(patches, wp, bp)


def pallas_fc_stack(feat, w3, b3, w4, b4, w5, b5, block_m=256):
    """Fused (relu(relu(x@w3+b3)@w4+b4))@w5+b5 with lane-padded widths."""
    m, k = feat.shape
    n3, n4, n5 = w3.shape[1], w4.shape[1], w5.shape[1]
    tm, n_blocks = _tile_m(m, block_m)
    return pl.pallas_call(
        _fc_stack_kernel,
        out_shape=jax.ShapeDtypeStruct((m, n5), jnp.float32),
        grid=(n_blocks,),
        in_specs=[
            pl.BlockSpec((tm, k), lambda i: (i, 0)),
            pl.BlockSpec((k, n3), lambda i: (0, 0)),
            pl.BlockSpec((1, n3), lambda i: (0, 0)),
            pl.BlockSpec((n3, n4), lambda i: (0, 0)),
            pl.BlockSpec((1, n4), lambda i: (0, 0)),
            pl.BlockSpec((n4, n5), lambda i: (0, 0)),
            pl.BlockSpec((1, n5), lambda i: (0, 0)),
        ],
        out_specs=pl.BlockSpec((tm, n5), lambda i: (i, 0)),
        compiler_params=_PARALLEL,
    )(feat, w3, b3, w4, b4, w5, b5)


# ---------------------------------------------------------------------------
# im2col glue (channels-last, pooling-quadrant row order)
# ---------------------------------------------------------------------------
def _im2col_pool_quadrants(x, kh, kw, pad):
    """(B,H,W,C) -> ((4, B*Hp*Wp, kh*kw*C), Hp, Wp).

    Quadrant q = 2*di+dj contains, for each pooled output pixel (b, oh, ow),
    the flattened (ki, kj, c) patch feeding conv-output pixel
    (2*oh+di, 2*ow+dj).  XLA fuses the stack/slice chain into one producer.
    """
    # TODO(synk): build these patches inside the Pallas kernel from an
    # HBM-resident image (memory_space=pl.ANY) to avoid the kh*kw expansion.
    b, h, w, c = x.shape
    xp = jnp.pad(x, ((0, 0), (pad, pad), (pad, pad), (0, 0)))
    ho = h + 2 * pad - kh + 1
    wo = w + 2 * pad - kw + 1
    hp, wp = ho // 2, wo // 2
    cols = [xp[:, i:i + ho, j:j + wo, :] for i in range(kh) for j in range(kw)]
    p = jnp.stack(cols, axis=3).reshape(b, ho, wo, kh * kw * c)
    quads = [p[:, di::2, dj::2, :].reshape(b * hp * wp, kh * kw * c)
             for di in (0, 1) for dj in (0, 1)]
    return jnp.stack(quads, axis=0), hp, wp


# ---------------------------------------------------------------------------
# Parameters: PyTorch-layout init + one-time relayout/padding
# ---------------------------------------------------------------------------
def init_lenet5_params(key, num_classes):
    def kaiming(k, shape, fan_in):
        return jax.random.normal(k, shape, jnp.float32) * jnp.sqrt(2.0 / fan_in)

    ks = jax.random.split(key, 5)
    return {
        "conv1_w": kaiming(ks[0], (6, 1, 5, 5), 1 * 5 * 5),
        "conv1_b": jnp.zeros((6,), jnp.float32),
        "conv2_w": kaiming(ks[1], (16, 6, 5, 5), 6 * 5 * 5),
        "conv2_b": jnp.zeros((16,), jnp.float32),
        "fc3_w": kaiming(ks[2], (120, 400), 400),
        "fc3_b": jnp.zeros((120,), jnp.float32),
        "fc4_w": kaiming(ks[3], (84, 120), 120),
        "fc4_b": jnp.zeros((84,), jnp.float32),
        "fc5_w": kaiming(ks[4], (num_classes, 84), 84),
        "fc5_b": jnp.zeros((num_classes,), jnp.float32),
    }


def prepare_params(params):
    """One-time weight relayout/zero-padding. Do OUTSIDE jit, never per call."""
    def conv_w(w):
        cout, cin, kh, kw = w.shape
        # (Cout,Cin,kh,kw) -> (kh*kw*Cin, Cout) matching im2col column order.
        return _pad_cols(w.transpose(2, 3, 1, 0).reshape(kh * kw * cin, cout))

    def vec(v):
        return _pad_cols(v.reshape(1, -1))

    # fc3: permute columns from PyTorch's (c,h,w) flatten order to the
    # channels-last (h,w,c) order, then (K,N) layout with lane-padded N.
    fc3 = params["fc3_w"].reshape(120, 16, 5, 5).transpose(0, 2, 3, 1)
    fc3 = _pad_cols(fc3.reshape(120, 400).T)                       # (400, 128)
    n3p = fc3.shape[1]
    fc4 = params["fc4_w"].T                                        # (120, 84)
    fc4 = jnp.pad(fc4, ((0, n3p - fc4.shape[0]), (0, (-fc4.shape[1]) % _LANE)))
    n4p = fc4.shape[1]
    fc5 = params["fc5_w"].T                                        # (84, nc)
    fc5 = jnp.pad(fc5, ((0, n4p - fc5.shape[0]), (0, (-fc5.shape[1]) % _LANE)))

    return {
        "conv1_w": conv_w(params["conv1_w"]), "conv1_b": vec(params["conv1_b"]),
        "conv2_w": conv_w(params["conv2_w"]), "conv2_b": vec(params["conv2_b"]),
        "fc3_w": fc3, "fc3_b": vec(params["fc3_b"]),
        "fc4_w": fc4, "fc4_b": vec(params["fc4_b"]),
        "fc5_w": fc5, "fc5_b": vec(params["fc5_b"]),
    }


# ---------------------------------------------------------------------------
# LeNet5 forward (PyTorch semantics)
# ---------------------------------------------------------------------------
def lenet5_forward(prep, x, *, num_classes):
    """x: (B, 1, 28, 28) float32 NCHW (as PyTorch)."""
    b = x.shape[0]
    x = jnp.transpose(x, (0, 2, 3, 1))                          # NHWC

    # conv1 (k=5, pad=2) + ReLU + 2x2 max-pool, fused in one kernel.
    p1, h1p, w1p = _im2col_pool_quadrants(x, 5, 5, pad=2)       # (4, B*196, 25)
    y1 = pallas_conv_pool(p1, prep["conv1_w"], prep["conv1_b"]) # (B*196, 128)

    # conv2 (k=5, pad=0) + ReLU + 2x2 max-pool, fused in one kernel.
    x2 = y1[:, :6].reshape(b, h1p, w1p, 6)                      # (B,14,14,6)
    p2, h2p, w2p = _im2col_pool_quadrants(x2, 5, 5, pad=0)      # (4, B*25, 150)
    y2 = pallas_conv_pool(p2, prep["conv2_w"], prep["conv2_b"]) # (B*25, 128)

    # flatten in (h,w,c) order; fc3 weight columns were pre-permuted to match.
    feat = y2[:, :16].reshape(b, h2p * w2p * 16)                # (B, 400)

    out = pallas_fc_stack(feat, prep["fc3_w"], prep["fc3_b"],
                          prep["fc4_w"], prep["fc4_b"],
                          prep["fc5_w"], prep["fc5_b"])         # (B, 128)
    return out[:, :num_classes]


# ---------------------------------------------------------------------------
# Plain-XLA reference (verification only)
# ---------------------------------------------------------------------------
def _reference_forward(params, x):
    def conv(z, w, bias, pad):
        z = jax.lax.conv_general_dilated(
            z, w, window_strides=(1, 1), padding=((pad, pad), (pad, pad)),
            dimension_numbers=("NCHW", "OIHW", "NCHW"))
        return z + bias.reshape(1, -1, 1, 1)

    def pool(z):
        return jax.lax.reduce_window(z, -jnp.inf, jax.lax.max,
                                     (1, 1, 2, 2), (1, 1, 2, 2), "VALID")

    z = pool(jax.nn.relu(conv(x, params["conv1_w"], params["conv1_b"], 2)))
    z = pool(jax.nn.relu(conv(z, params["conv2_w"], params["conv2_b"], 0)))
    z = z.reshape(-1, 400)
    z = jax.nn.relu(z @ params["fc3_w"].T + params["fc3_b"])
    z = jax.nn.relu(z @ params["fc4_w"].T + params["fc4_b"])
    return z @ params["fc5_w"].T + params["fc5_b"]


if __name__ == "__main__":
    num_classes = 10
    key = jax.random.PRNGKey(0)
    k_param, k_in = jax.random.split(key)
    params = init_lenet5_params(k_param, num_classes)
    prep = prepare_params(params)          # one-time relayout, outside jit

    # LeNet5 requires 28x28x1 input so the flatten produces 400 features.
    x = jax.random.normal(k_in, (2, 1, 28, 28), dtype=jnp.float32)

    fwd = jax.jit(lenet5_forward, static_argnames=("num_classes",))
    y = fwd(prep, x, num_classes=num_classes)
    jax.block_until_ready(y)
    assert y.shape == (2, num_classes), y.shape

    # Numerical check against a plain-XLA reference (loose tol covers MXU
    # default-precision differences).
    y_ref = _reference_forward(params, x)
    err = float(jnp.max(jnp.abs(y - y_ref)))
    assert jnp.allclose(y, y_ref, rtol=5e-2, atol=5e-2), err

    print("KERNEL_OK")
</pallas_src>

<mosaic_0001>
module attributes {stable_mosaic.version = 11 : i64} {
  func.func @_conv_pool_kernel(%arg0: i32, %arg1: memref<4x392x25xf32, #tpu.memory_space<vmem>>, %arg2: memref<25x128xf32, #tpu.memory_space<vmem>>, %arg3: memref<1x128xf32, #tpu.memory_space<vmem>>, %arg4: memref<392x128xf32, #tpu.memory_space<vmem>>) attributes {dimension_semantics = [#tpu.dimension_semantics<parallel>], iteration_bounds = array<i64: 1>, scalar_prefetch = 0 : i64, scratch_operands = 0 : i64, tpu.core_type = #tpu.core_type<tc>, window_params = [{transform_indices = @transform_0, window_bounds = array<i64: 4, 392, 25>}, {pipeline_mode = #tpu.pipeline_mode<synchronous>, transform_indices = @transform_1, window_bounds = array<i64: 25, 128>}, {pipeline_mode = #tpu.pipeline_mode<synchronous>, transform_indices = @transform_2, window_bounds = array<i64: 1, 128>}, {transform_indices = @transform_3, window_bounds = array<i64: 392, 128>}]} {
    %c0 = arith.constant 0 : index
    %c0_0 = arith.constant 0 : index
    %0 = vector.load %arg2[%c0, %c0_0] : memref<25x128xf32, #tpu.memory_space<vmem>>, vector<25x128xf32>
    %c0_1 = arith.constant 0 : index
    %c0_2 = arith.constant 0 : index
    %1 = vector.load %arg3[%c0_1, %c0_2] : memref<1x128xf32, #tpu.memory_space<vmem>>, vector<1x128xf32>
    %c0_3 = arith.constant 0 : index
    %c0_4 = arith.constant 0 : index
    %c0_5 = arith.constant 0 : index
    %2 = vector.load %arg1[%c0_3, %c0_4, %c0_5] : memref<4x392x25xf32, #tpu.memory_space<vmem>>, vector<1x392x25xf32>
    %3 = vector.shape_cast %2 : vector<1x392x25xf32> to vector<392x25xf32>
    %cst = arith.constant dense<0.000000e+00> : vector<392x128xf32>
    %4 = tpu.matmul %3, %0, %cst {dimension_numbers = #tpu.dot_dimension_numbers<[1], [0], [0], [1], [0, 0, 1, 1], [], []>} : vector<392x25xf32>, vector<25x128xf32>, vector<392x128xf32> -> vector<392x128xf32>
    %5 = vector.broadcast %1 : vector<1x128xf32> to vector<392x128xf32>
    %6 = arith.addf %4, %5 : vector<392x128xf32>
    %c1 = arith.constant 1 : index
    %c0_6 = arith.constant 0 : index
    %c0_7 = arith.constant 0 : index
    %7 = vector.load %arg1[%c1, %c0_6, %c0_7] : memref<4x392x25xf32, #tpu.memory_space<vmem>>, vector<1x392x25xf32>
    %8 = vector.shape_cast %7 : vector<1x392x25xf32> to vector<392x25xf32>
    %cst_8 = arith.constant dense<0.000000e+00> : vector<392x128xf32>
    %9 = tpu.matmul %8, %0, %cst_8 {dimension_numbers = #tpu.dot_dimension_numbers<[1], [0], [0], [1], [0, 0, 1, 1], [], []>} : vector<392x25xf32>, vector<25x128xf32>, vector<392x128xf32> -> vector<392x128xf32>
    %10 = vector.broadcast %1 : vector<1x128xf32> to vector<392x128xf32>
    %11 = arith.addf %9, %10 : vector<392x128xf32>
    %12 = arith.maximumf %6, %11 : vector<392x128xf32>
    %c2 = arith.constant 2 : index
    %c0_9 = arith.constant 0 : index
    %c0_10 = arith.constant 0 : index
    %13 = vector.load %arg1[%c2, %c0_9, %c0_10] : memref<4x392x25xf32, #tpu.memory_space<vmem>>, vector<1x392x25xf32>
    %14 = vector.shape_cast %13 : vector<1x392x25xf32> to vector<392x25xf32>
    %cst_11 = arith.constant dense<0.000000e+00> : vector<392x128xf32>
    %15 = tpu.matmul %14, %0, %cst_11 {dimension_numbers = #tpu.dot_dimension_numbers<[1], [0], [0], [1], [0, 0, 1, 1], [], []>} : vector<392x25xf32>, vector<25x128xf32>, vector<392x128xf32> -> vector<392x128xf32>
    %16 = vector.broadcast %1 : vector<1x128xf32> to vector<392x128xf32>
    %17 = arith.addf %15, %16 : vector<392x128xf32>
    %18 = arith.maximumf %12, %17 : vector<392x128xf32>
    %c3 = arith.constant 3 : index
    %c0_12 = arith.constant 0 : index
    %c0_13 = arith.constant 0 : index
    %19 = vector.load %arg1[%c3, %c0_12, %c0_13] : memref<4x392x25xf32, #tpu.memory_space<vmem>>, vector<1x392x25xf32>
    %20 = vector.shape_cast %19 : vector<1x392x25xf32> to vector<392x25xf32>
    %cst_14 = arith.constant dense<0.000000e+00> : vector<392x128xf32>
    %21 = tpu.matmul %20, %0, %cst_14 {dimension_numbers = #tpu.dot_dimension_numbers<[1], [0], [0], [1], [0, 0, 1, 1], [], []>} : vector<392x25xf32>, vector<25x128xf32>, vector<392x128xf32> -> vector<392x128xf32>
    %22 = vector.broadcast %1 : vector<1x128xf32> to vector<392x128xf32>
    %23 = arith.addf %21, %22 : vector<392x128xf32>
    %24 = arith.maximumf %18, %23 : vector<392x128xf32>
    %cst_15 = arith.constant 0.000000e+00 : f32
    %25 = vector.broadcast %cst_15 : f32 to vector<392x128xf32>
    %26 = arith.maximumf %24, %25 : vector<392x128xf32>
    %c0_16 = arith.constant 0 : index
    %c0_17 = arith.constant 0 : index
    %27 = vector.load %arg4[%c0_16, %c0_17] : memref<392x128xf32, #tpu.memory_space<vmem>>, vector<392x128xf32>
    tpu.vector_store %arg4[%c0_16, %c0_17], %26 {strides = array<i32>} : memref<392x128xf32, #tpu.memory_space<vmem>>, vector<392x128xf32>,
    return
  }
  func.func @transform_0(%arg0: i32) -> (i32, i32, i32) {
    %c0_i32 = arith.constant 0 : i32
    %c0_i32_0 = arith.constant 0 : i32
    %c0_i32_1 = arith.constant 0 : i32
    return %c0_i32, %arg0, %c0_i32_0 : i32, i32, i32
  }
  func.func @transform_1(%arg0: i32) -> (i32, i32) {
    %c0_i32 = arith.constant 0 : i32
    %c0_i32_0 = arith.constant 0 : i32
    %c0_i32_1 = arith.constant 0 : i32
    return %c0_i32, %c0_i32_0 : i32, i32
  }
  func.func @transform_2(%arg0: i32) -> (i32, i32) {
    %c0_i32 = arith.constant 0 : i32
    %c0_i32_0 = arith.constant 0 : i32
    %c0_i32_1 = arith.constant 0 : i32
    return %c0_i32, %c0_i32_0 : i32, i32
  }
  func.func @transform_3(%arg0: i32) -> (i32, i32) {
    %c0_i32 = arith.constant 0 : i32
    %c0_i32_0 = arith.constant 0 : i32
    return %arg0, %c0_i32 : i32, i32
  }
}

module attributes {stable_mosaic.version = 11 : i64} {
  func.func @_conv_pool_kernel(%arg0: i32, %arg1: memref<4x50x150xf32, #tpu.memory_space<vmem>>, %arg2: memref<150x128xf32, #tpu.memory_space<vmem>>, %arg3: memref<1x128xf32, #tpu.memory_space<vmem>>, %arg4: memref<50x128xf32, #tpu.memory_space<vmem>>) attributes {dimension_semantics = [#tpu.dimension_semantics<parallel>], iteration_bounds = array<i64: 1>, scalar_prefetch = 0 : i64, scratch_operands = 0 : i64, tpu.core_type = #tpu.core_type<tc>, window_params = [{transform_indices = @transform_0, window_bounds = array<i64: 4, 50, 150>}, {pipeline_mode = #tpu.pipeline_mode<synchronous>, transform_indices = @transform_1, window_bounds = array<i64: 150, 128>}, {pipeline_mode = #tpu.pipeline_mode<synchronous>, transform_indices = @transform_2, window_bounds = array<i64: 1, 128>}, {transform_indices = @transform_3, window_bounds = array<i64: 50, 128>}]} {
    %c0 = arith.constant 0 : index
    %c0_0 = arith.constant 0 : index
    %0 = vector.load %arg2[%c0, %c0_0] : memref<150x128xf32, #tpu.memory_space<vmem>>, vector<150x128xf32>
    %c0_1 = arith.constant 0 : index
    %c0_2 = arith.constant 0 : index
    %1 = vector.load %arg3[%c0_1, %c0_2] : memref<1x128xf32, #tpu.memory_space<vmem>>, vector<1x128xf32>
    %c0_3 = arith.constant 0 : index
    %c0_4 = arith.constant 0 : index
    %c0_5 = arith.constant 0 : index
    %2 = vector.load %arg1[%c0_3, %c0_4, %c0_5] : memref<4x50x150xf32, #tpu.memory_space<vmem>>, vector<1x50x150xf32>
    %3 = vector.shape_cast %2 : vector<1x50x150xf32> to vector<50x150xf32>
    %cst = arith.constant dense<0.000000e+00> : vector<50x128xf32>
    %4 = tpu.matmul %3, %0, %cst {dimension_numbers = #tpu.dot_dimension_numbers<[1], [0], [0], [1], [0, 0, 1, 1], [], []>} : vector<50x150xf32>, vector<150x128xf32>, vector<50x128xf32> -> vector<50x128xf32>
    %5 = vector.broadcast %1 : vector<1x128xf32> to vector<50x128xf32>
    %6 = arith.addf %4, %5 : vector<50x128xf32>
    %c1 = arith.constant 1 : index
    %c0_6 = arith.constant 0 : index
    %c0_7 = arith.constant 0 : index
    %7 = vector.load %arg1[%c1, %c0_6, %c0_7] : memref<4x50x150xf32, #tpu.memory_space<vmem>>, vector<1x50x150xf32>
    %8 = vector.shape_cast %7 : vector<1x50x150xf32> to vector<50x150xf32>
    %cst_8 = arith.constant dense<0.000000e+00> : vector<50x128xf32>
    %9 = tpu.matmul %8, %0, %cst_8 {dimension_numbers = #tpu.dot_dimension_numbers<[1], [0], [0], [1], [0, 0, 1, 1], [], []>} : vector<50x150xf32>, vector<150x128xf32>, vector<50x128xf32> -> vector<50x128xf32>
    %10 = vector.broadcast %1 : vector<1x128xf32> to vector<50x128xf32>
    %11 = arith.addf %9, %10 : vector<50x128xf32>
    %12 = arith.maximumf %6, %11 : vector<50x128xf32>
    %c2 = arith.constant 2 : index
    %c0_9 = arith.constant 0 : index
    %c0_10 = arith.constant 0 : index
    %13 = vector.load %arg1[%c2, %c0_9, %c0_10] : memref<4x50x150xf32, #tpu.memory_space<vmem>>, vector<1x50x150xf32>
    %14 = vector.shape_cast %13 : vector<1x50x150xf32> to vector<50x150xf32>
    %cst_11 = arith.constant dense<0.000000e+00> : vector<50x128xf32>
    %15 = tpu.matmul %14, %0, %cst_11 {dimension_numbers = #tpu.dot_dimension_numbers<[1], [0], [0], [1], [0, 0, 1, 1], [], []>} : vector<50x150xf32>, vector<150x128xf32>, vector<50x128xf32> -> vector<50x128xf32>
    %16 = vector.broadcast %1 : vector<1x128xf32> to vector<50x128xf32>
    %17 = arith.addf %15, %16 : vector<50x128xf32>
    %18 = arith.maximumf %12, %17 : vector<50x128xf32>
    %c3 = arith.constant 3 : index
    %c0_12 = arith.constant 0 : index
    %c0_13 = arith.constant 0 : index
    %19 = vector.load %arg1[%c3, %c0_12, %c0_13] : memref<4x50x150xf32, #tpu.memory_space<vmem>>, vector<1x50x150xf32>
    %20 = vector.shape_cast %19 : vector<1x50x150xf32> to vector<50x150xf32>
    %cst_14 = arith.constant dense<0.000000e+00> : vector<50x128xf32>
    %21 = tpu.matmul %20, %0, %cst_14 {dimension_numbers = #tpu.dot_dimension_numbers<[1], [0], [0], [1], [0, 0, 1, 1], [], []>} : vector<50x150xf32>, vector<150x128xf32>, vector<50x128xf32> -> vector<50x128xf32>
    %22 = vector.broadcast %1 : vector<1x128xf32> to vector<50x128xf32>
    %23 = arith.addf %21, %22 : vector<50x128xf32>
    %24 = arith.maximumf %18, %23 : vector<50x128xf32>
    %cst_15 = arith.constant 0.000000e+00 : f32
    %25 = vector.broadcast %cst_15 : f32 to vector<50x128xf32>
    %26 = arith.maximumf %24, %25 : vector<50x128xf32>
    %c0_16 = arith.constant 0 : index
    %c0_17 = arith.constant 0 : index
    %27 = vector.load %arg4[%c0_16, %c0_17] : memref<50x128xf32, #tpu.memory_space<vmem>>, vector<50x128xf32>
    tpu.vector_store %arg4[%c0_16, %c0_17], %26 {strides = array<i32>} : memref<50x128xf32, #tpu.memory_space<vmem>>, vector<50x128xf32>,
    return
  }
  func.func @transform_0(%arg0: i32) -> (i32, i32, i32) {
    %c0_i32 = arith.constant 0 : i32
    %c0_i32_0 = arith.constant 0 : i32
    %c0_i32_1 = arith.constant 0 : i32
    return %c0_i32, %arg0, %c0_i32_0 : i32, i32, i32
  }
  func.func @transform_1(%arg0: i32) -> (i32, i32) {
    %c0_i32 = arith.constant 0 : i32
    %c0_i32_0 = arith.constant 0 : i32
    %c0_i32_1 = arith.constant 0 : i32
    return %c0_i32, %c0_i32_0 : i32, i32
  }
  func.func @transform_2(%arg0: i32) -> (i32, i32) {
    %c0_i32 = arith.constant 0 : i32
    %c0_i32_0 = arith.constant 0 : i32
    %c0_i32_1 = arith.constant 0 : i32
    return %c0_i32, %c0_i32_0 : i32, i32
  }
  func.func @transform_3(%arg0: i32) -> (i32, i32) {
    %c0_i32 = arith.constant 0 : i32
    %c0_i32_0 = arith.constant 0 : i32
    return %arg0, %c0_i32 : i32, i32
  }
}

module attributes {stable_mosaic.version = 11 : i64} {
  func.func @_fc_stack_kernel(%arg0: i32, %arg1: memref<2x400xf32, #tpu.memory_space<vmem>>, %arg2: memref<400x128xf32, #tpu.memory_space<vmem>>, %arg3: memref<1x128xf32, #tpu.memory_space<vmem>>, %arg4: memref<128x128xf32, #tpu.memory_space<vmem>>, %arg5: memref<1x128xf32, #tpu.memory_space<vmem>>, %arg6: memref<128x128xf32, #tpu.memory_space<vmem>>, %arg7: memref<1x128xf32, #tpu.memory_space<vmem>>, %arg8: memref<2x128xf32, #tpu.memory_space<vmem>>) attributes {dimension_semantics = [#tpu.dimension_semantics<parallel>], iteration_bounds = array<i64: 1>, scalar_prefetch = 0 : i64, scratch_operands = 0 : i64, tpu.core_type = #tpu.core_type<tc>, window_params = [{transform_indices = @transform_0, window_bounds = array<i64: 2, 400>}, {pipeline_mode = #tpu.pipeline_mode<synchronous>, transform_indices = @transform_1, window_bounds = array<i64: 400, 128>}, {pipeline_mode = #tpu.pipeline_mode<synchronous>, transform_indices = @transform_2, window_bounds = array<i64: 1, 128>}, {pipeline_mode = #tpu.pipeline_mode<synchronous>, transform_indices = @transform_3, window_bounds = array<i64: 128, 128>}, {pipeline_mode = #tpu.pipeline_mode<synchronous>, transform_indices = @transform_4, window_bounds = array<i64: 1, 128>}, {pipeline_mode = #tpu.pipeline_mode<synchronous>, transform_indices = @transform_5, window_bounds = array<i64: 128, 128>}, {pipeline_mode = #tpu.pipeline_mode<synchronous>, transform_indices = @transform_6, window_bounds = array<i64: 1, 128>}, {transform_indices = @transform_7, window_bounds = array<i64: 2, 128>}]} {
    %c0 = arith.constant 0 : index
    %c0_0 = arith.constant 0 : index
    %0 = vector.load %arg1[%c0, %c0_0] : memref<2x400xf32, #tpu.memory_space<vmem>>, vector<2x400xf32>
    %c0_1 = arith.constant 0 : index
    %c0_2 = arith.constant 0 : index
    %1 = vector.load %arg2[%c0_1, %c0_2] : memref<400x128xf32, #tpu.memory_space<vmem>>, vector<400x128xf32>
    %cst = arith.constant dense<0.000000e+00> : vector<2x128xf32>
    %2 = tpu.matmul %0, %1, %cst {dimension_numbers = #tpu.dot_dimension_numbers<[1], [0], [0], [1], [0, 0, 1, 1], [], []>} : vector<2x400xf32>, vector<400x128xf32>, vector<2x128xf32> -> vector<2x128xf32>
    %c0_3 = arith.constant 0 : index
    %c0_4 = arith.constant 0 : index
    %3 = vector.load %arg3[%c0_3, %c0_4] : memref<1x128xf32, #tpu.memory_space<vmem>>, vector<1x128xf32>
    %4 = vector.broadcast %3 : vector<1x128xf32> to vector<2x128xf32>
    %5 = arith.addf %2, %4 : vector<2x128xf32>
    %cst_5 = arith.constant 0.000000e+00 : f32
    %6 = vector.broadcast %cst_5 : f32 to vector<2x128xf32>
    %7 = arith.maximumf %5, %6 : vector<2x128xf32>
    %c0_6 = arith.constant 0 : index
    %c0_7 = arith.constant 0 : index
    %8 = vector.load %arg4[%c0_6, %c0_7] : memref<128x128xf32, #tpu.memory_space<vmem>>, vector<128x128xf32>
    %cst_8 = arith.constant dense<0.000000e+00> : vector<2x128xf32>
    %9 = tpu.matmul %7, %8, %cst_8 {dimension_numbers = #tpu.dot_dimension_numbers<[1], [0], [0], [1], [0, 0, 1, 1], [], []>} : vector<2x128xf32>, vector<128x128xf32>, vector<2x128xf32> -> vector<2x128xf32>
    %c0_9 = arith.constant 0 : index
    %c0_10 = arith.constant 0 : index
    %10 = vector.load %arg5[%c0_9, %c0_10] : memref<1x128xf32, #tpu.memory_space<vmem>>, vector<1x128xf32>
    %11 = vector.broadcast %10 : vector<1x128xf32> to vector<2x128xf32>
    %12 = arith.addf %9, %11 : vector<2x128xf32>
    %cst_11 = arith.constant 0.000000e+00 : f32
    %13 = vector.broadcast %cst_11 : f32 to vector<2x128xf32>
    %14 = arith.maximumf %12, %13 : vector<2x128xf32>
    %c0_12 = arith.constant 0 : index
    %c0_13 = arith.constant 0 : index
    %15 = vector.load %arg6[%c0_12, %c0_13] : memref<128x128xf32, #tpu.memory_space<vmem>>, vector<128x128xf32>
    %cst_14 = arith.constant dense<0.000000e+00> : vector<2x128xf32>
    %16 = tpu.matmul %14, %15, %cst_14 {dimension_numbers = #tpu.dot_dimension_numbers<[1], [0], [0], [1], [0, 0, 1, 1], [], []>} : vector<2x128xf32>, vector<128x128xf32>, vector<2x128xf32> -> vector<2x128xf32>
    %c0_15 = arith.constant 0 : index
    %c0_16 = arith.constant 0 : index
    %17 = vector.load %arg7[%c0_15, %c0_16] : memref<1x128xf32, #tpu.memory_space<vmem>>, vector<1x128xf32>
    %18 = vector.broadcast %17 : vector<1x128xf32> to vector<2x128xf32>
    %19 = arith.addf %16, %18 : vector<2x128xf32>
    %c0_17 = arith.constant 0 : index
    %c0_18 = arith.constant 0 : index
    %20 = vector.load %arg8[%c0_17, %c0_18] : memref<2x128xf32, #tpu.memory_space<vmem>>, vector<2x128xf32>
    tpu.vector_store %arg8[%c0_17, %c0_18], %19 {strides = array<i32>} : memref<2x128xf32, #tpu.memory_space<vmem>>, vector<2x128xf32>,
    return
  }
  func.func @transform_0(%arg0: i32) -> (i32, i32) {
    %c0_i32 = arith.constant 0 : i32
    %c0_i32_0 = arith.constant 0 : i32
    return %arg0, %c0_i32 : i32, i32
  }
  func.func @transform_1(%arg0: i32) -> (i32, i32) {
    %c0_i32 = arith.constant 0 : i32
    %c0_i32_0 = arith.constant 0 : i32
    %c0_i32_1 = arith.constant 0 : i32
    return %c0_i32, %c0_i32_0 : i32, i32
  }
  func.func @transform_2(%arg0: i32) -> (i32, i32) {
    %c0_i32 = arith.constant 0 : i32
    %c0_i32_0 = arith.constant 0 : i32
    %c0_i32_1 = arith.constant 0 : i32
    return %c0_i32, %c0_i32_0 : i32, i32
  }
  func.func @transform_3(%arg0: i32) -> (i32, i32) {
    %c0_i32 = arith.constant 0 : i32
    %c0_i32_0 = arith.constant 0 : i32
    %c0_i32_1 = arith.constant 0 : i32
    return %c0_i32, %c0_i32_0 : i32, i32
  }
  func.func @transform_4(%arg0: i32) -> (i32, i32) {
    %c0_i32 = arith.constant 0 : i32
    %c0_i32_0 = arith.constant 0 : i32
    %c0_i32_1 = arith.constant 0 : i32
    return %c0_i32, %c0_i32_0 : i32, i32
  }
  func.func @transform_5(%arg0: i32) -> (i32, i32) {
    %c0_i32 = arith.constant 0 : i32
    %c0_i32_0 = arith.constant 0 : i32
    %c0_i32_1 = arith.constant 0 : i32
    return %c0_i32, %c0_i32_0 : i32, i32
  }
  func.func @transform_6(%arg0: i32) -> (i32, i32) {
    %c0_i32 = arith.constant 0 : i32
    %c0_i32_0 = arith.constant 0 : i32
    %c0_i32_1 = arith.constant 0 : i32
    return %c0_i32, %c0_i32_0 : i32, i32
  }
  func.func @transform_7(%arg0: i32) -> (i32, i32) {
    %c0_i32 = arith.constant 0 : i32
    %c0_i32_0 = arith.constant 0 : i32
    return %arg0, %c0_i32 : i32, i32
  }
}

</mosaic_0001>

<llo_original>
// kernel: lenet5_forward.3
$region0: #{lenet5_forward.3}
  #allocation0 [shape = 'u32[]', space=smem, size = 0x4, offset = 0x4, fixed_abs, tag = 'smem constant byte address 0x4 - core index']
  #allocation1 [shape = 'u32[72,128]{1,0:T(1,128)}', space=vmem, size = 0x9000, scoped, tag = 'internal scratch']
  %s0 = inlined_call_operand.vmem [shape: f32[4,392,25], index: 0, kind: input, shape index: {}]
  %s1 = inlined_call_operand.vmem [shape: f32[25,128], index: 1, kind: input, shape index: {}]
  %s2 = inlined_call_operand.vmem [shape: f32[1,128], index: 2, kind: input, shape index: {}]
  %s3 = inlined_call_operand.vmem [shape: f32[392,128], index: 3, kind: output, shape index: {}]
  %s4 = sld [smem:[#allocation0]]
  $region22: #{lenet5_forward.3} parent=0
    _
  %s6 = ssub.s32 1, %s4
  %s7 = scalar_select 0, %s6, %s4
  // Predicated region
  $region2: #{lenet5_forward.3} parent=0 // pred_check
    _
  $region3: #{lenet5_forward.3} parent=0 // pred_check_branch
    %9 = sbr.rel (0) target = $region5
  $region4: #{lenet5_forward.3} parent=0 // pred_region
    _
  $region5: #{lenet5_forward.3} parent=0 // pred_fallthru
    _
  // Predicated region
  $region6: #{lenet5_forward.3} parent=0 // pred_check
    _
  $region7: #{lenet5_forward.3} parent=0 // pred_check_branch
    %11 = sbr.rel (0) target = $region9
  $region8: #{lenet5_forward.3} parent=0 // pred_region
    _
  $region9: #{lenet5_forward.3} parent=0 // pred_fallthru
    _
  // Predicated region
  $region10: #{lenet5_forward.3} parent=0 // pred_check
    _
  $region11: #{lenet5_forward.3} parent=0 // pred_check_branch
    %13 = sbr.rel (0) target = $region13
  $region12: #{lenet5_forward.3} parent=0 // pred_region
    _
  $region13: #{lenet5_forward.3} parent=0 // pred_fallthru
    _
  %v14 = vld [vmem:[%s1] sm:$0xff]
  %v15 = vld [vmem:[%s1 + $0x8] sm:$0xff]
  %v16 = vld [vmem:[%s1 + $0x10] sm:$0xff]
  %v17 = vld [vmem:[%s1 + $0x18] sm:$0x1]
  %v18 = vld [vmem:[%s2] sm:$0x1]
  %v19 = vld [vmem:[%s0] sm:$0xff]
  %v20 = vld [vmem:[%s0 + $0x8] sm:$0xff]
  %v21 = vld [vmem:[%s0 + $0x10] sm:$0xff]
  %v22 = vld [vmem:[%s0 + $0x18] sm:$0xff]
  %v23 = vld [vmem:[%s0 + $0x20] sm:$0xff]
  %v24 = vld [vmem:[%s0 + $0x28] sm:$0xff]
  %v25 = vld [vmem:[%s0 + $0x30] sm:$0xff]
  %v26 = vld [vmem:[%s0 + $0x38] sm:$0xff]
  %v27 = vld [vmem:[%s0 + $0x40] sm:$0xff]
  %v28 = vld [vmem:[%s0 + $0x48] sm:$0xff]
  %v29 = vld [vmem:[%s0 + $0x50] sm:$0xff]
  %v30 = vld [vmem:[%s0 + $0x58] sm:$0xff]
  %v31 = vld [vmem:[%s0 + $0x60] sm:$0xff]
  %v32 = vld [vmem:[%s0 + $0x68] sm:$0xff]
  %v33 = vld [vmem:[%s0 + $0x70] sm:$0xff]
  %v34 = vld [vmem:[%s0 + $0x78] sm:$0xff]
  %v35 = vld [vmem:[%s0 + $0x80] sm:$0xff]
  %v36 = vld [vmem:[%s0 + $0x88] sm:$0xff]
  %v37 = vld [vmem:[%s0 + $0x90] sm:$0xff]
  %v38 = vld [vmem:[%s0 + $0x98] sm:$0xff]
  %v39 = vld [vmem:[%s0 + $0xa0] sm:$0xff]
  %v40 = vld [vmem:[%s0 + $0xa8] sm:$0xff]
  %v41 = vld [vmem:[%s0 + $0xb0] sm:$0xff]
  %v42 = vld [vmem:[%s0 + $0xb8] sm:$0xff]
  %v43 = vld [vmem:[%s0 + $0xc0] sm:$0xff]
  %v44 = vld [vmem:[%s0 + $0xc8] sm:$0xff]
  %v45 = vld [vmem:[%s0 + $0xd0] sm:$0xff]
  %v46 = vld [vmem:[%s0 + $0xd8] sm:$0xff]
  %v47 = vld [vmem:[%s0 + $0xe0] sm:$0xff]
  %v48 = vld [vmem:[%s0 + $0xe8] sm:$0xff]
  %v49 = vld [vmem:[%s0 + $0xf0] sm:$0xff]
  %v50 = vld [vmem:[%s0 + $0xf8] sm:$0xff]
  %v51 = vld [vmem:[%s0 + $0x100] sm:$0xff]
  %v52 = vld [vmem:[%s0 + $0x108] sm:$0xff]
  %v53 = vld [vmem:[%s0 + $0x110] sm:$0xff]
  %v54 = vld [vmem:[%s0 + $0x118] sm:$0xff]
  %v55 = vld [vmem:[%s0 + $0x120] sm:$0xff]
  %v56 = vld [vmem:[%s0 + $0x128] sm:$0xff]
  %v57 = vld [vmem:[%s0 + $0x130] sm:$0xff]
  %v58 = vld [vmem:[%s0 + $0x138] sm:$0xff]
  %v59 = vld [vmem:[%s0 + $0x140] sm:$0xff]
  %v60 = vld [vmem:[%s0 + $0x148] sm:$0xff]
  %v61 = vld [vmem:[%s0 + $0x150] sm:$0xff]
  %v62 = vld [vmem:[%s0 + $0x158] sm:$0xff]
  %v63 = vld [vmem:[%s0 + $0x160] sm:$0xff]
  %v64 = vld [vmem:[%s0 + $0x168] sm:$0xff]
  %v65 = vld [vmem:[%s0 + $0x170] sm:$0xff]
  %v66 = vld [vmem:[%s0 + $0x178] sm:$0xff]
  %v67 = vld [vmem:[%s0 + $0x180] sm:$0xff]
  %v69 = vperm.slane %v18, 0
  %vm71 = vcmask 203776
  %v73 = vsel %vm71, %v19, 0
  %v76 = vsel %vm71, %v20, 0
  %v79 = vsel %vm71, %v21, 0
  %v82 = vsel %vm71, %v22, 0
  %v85 = vsel %vm71, %v23, 0
  %v88 = vsel %vm71, %v24, 0
  %v91 = vsel %vm71, %v25, 0
  %v94 = vsel %vm71, %v26, 0
  %v97 = vsel %vm71, %v27, 0
  %v100 = vsel %vm71, %v28, 0
  %v103 = vsel %vm71, %v29, 0
  %v106 = vsel %vm71, %v30, 0
  %v109 = vsel %vm71, %v31, 0
  %v112 = vsel %vm71, %v32, 0
  %v115 = vsel %vm71, %v33, 0
  %v118 = vsel %vm71, %v34, 0
  %v121 = vsel %vm71, %v35, 0
  %v124 = vsel %vm71, %v36, 0
  %v127 = vsel %vm71, %v37, 0
  %v130 = vsel %vm71, %v38, 0
  %v133 = vsel %vm71, %v39, 0
  %v136 = vsel %vm71, %v40, 0
  %v139 = vsel %vm71, %v41, 0
  %v142 = vsel %vm71, %v42, 0
  %v145 = vsel %vm71, %v43, 0
  %v148 = vsel %vm71, %v44, 0
  %v151 = vsel %vm71, %v45, 0
  %v154 = vsel %vm71, %v46, 0
  %v157 = vsel %vm71, %v47, 0
  %v160 = vsel %vm71, %v48, 0
  %v163 = vsel %vm71, %v49, 0
  %v166 = vsel %vm71, %v50, 0
  %v169 = vsel %vm71, %v51, 0
  %v172 = vsel %vm71, %v52, 0
  %v175 = vsel %vm71, %v53, 0
  %v178 = vsel %vm71, %v54, 0
  %v181 = vsel %vm71, %v55, 0
  %v184 = vsel %vm71, %v56, 0
  %v187 = vsel %vm71, %v57, 0
  %v190 = vsel %vm71, %v58, 0
  %v193 = vsel %vm71, %v59, 0
  %v196 = vsel %vm71, %v60, 0
  %v199 = vsel %vm71, %v61, 0
  %v202 = vsel %vm71, %v62, 0
  %v205 = vsel %vm71, %v63, 0
  %v208 = vsel %vm71, %v64, 0
  %v211 = vsel %vm71, %v65, 0
  %v214 = vsel %vm71, %v66, 0
  %v217 = vsel %vm71, %v67, 0
  %vm219 = vcmask 1040384
  %v221 = vsel %vm219, %v17, 0
  %223 = vmatpush.msra.mxu0 0.0
  %224 = vmatpush.msra.mxu0 0.0
  %225 = vmatpush.msra.mxu0 0.0
  %226 = vmatpush.msra.mxu0 0.0
  %227 = vmatpush.msra.mxu0 0.0
  %228 = vmatpush.msra.mxu0 0.0
  %229 = vmatpush.msra.mxu0 0.0
  %230 = vmatpush.msra.mxu0 0.0
  %231 = vmatpush.msra.mxu0 0.0
  %232 = vmatpush.msra.mxu0 0.0
  %233 = vmatpush.msra.mxu0 0.0
  %234 = vmatpush.msra.mxu0 0.0
  %235 = vmatpush.msra.mxu0 %v221
  %236 = vmatpush.msra.mxu0 %v16
  %237 = vmatpush.msra.mxu0 %v15
  %238 = vmatpush.msra.mxu0 %v14
  %239 = vmatmul.f32.gmra.mxu0 %v73
  %v240 = vpop.f32.mrf.mxu0
  %v241 = vadd.f32 %v69, %v240
  %242 = vmatmul.f32.gmra.mxu0 %v76
  %v243 = vpop.f32.mrf.mxu0
  %v244 = vadd.f32 %v69, %v243
  %245 = vmatmul.f32.gmra.mxu0 %v79
  %v246 = vpop.f32.mrf.mxu0
  %v247 = vadd.f32 %v69, %v246
  %248 = vmatmul.f32.gmra.mxu0 %v82
  %v249 = vpop.f32.mrf.mxu0
  %v250 = vadd.f32 %v69, %v249
  %251 = vmatmul.f32.gmra.mxu0 %v85
  %v252 = vpop.f32.mrf.mxu0
  %v253 = vadd.f32 %v69, %v252
  %254 = vmatmul.f32.gmra.mxu0 %v88
  %v255 = vpop.f32.mrf.mxu0
  %v256 = vadd.f32 %v69, %v255
  %257 = vmatmul.f32.gmra.mxu0 %v91
  %v258 = vpop.f32.mrf.mxu0
  %v259 = vadd.f32 %v69, %v258
  %260 = vmatmul.f32.gmra.mxu0 %v94
  %v261 = vpop.f32.mrf.mxu0
  %v262 = vadd.f32 %v69, %v261
  %263 = vmatmul.f32.gmra.mxu0 %v97
  %v264 = vpop.f32.mrf.mxu0
  %v265 = vadd.f32 %v69, %v264
  %266 = vmatmul.f32.gmra.mxu0 %v100
  %v267 = vpop.f32.mrf.mxu0
  %v268 = vadd.f32 %v69, %v267
  %269 = vmatmul.f32.gmra.mxu0 %v103
  %v270 = vpop.f32.mrf.mxu0
  %v271 = vadd.f32 %v69, %v270
  %272 = vmatmul.f32.gmra.mxu0 %v106
  %v273 = vpop.f32.mrf.mxu0
  %v274 = vadd.f32 %v69, %v273
  %275 = vmatmul.f32.gmra.mxu0 %v109
  %v276 = vpop.f32.mrf.mxu0
  %v277 = vadd.f32 %v69, %v276
  %278 = vmatmul.f32.gmra.mxu0 %v112
  %v279 = vpop.f32.mrf.mxu0
  %v280 = vadd.f32 %v69, %v279
  %281 = vmatmul.f32.gmra.mxu0 %v115
  %v282 = vpop.f32.mrf.mxu0
  %v283 = vadd.f32 %v69, %v282
  %284 = vmatmul.f32.gmra.mxu0 %v118
  %v285 = vpop.f32.mrf.mxu0
  %v286 = vadd.f32 %v69, %v285
  %287 = vmatmul.f32.gmra.mxu0 %v121
  %v288 = vpop.f32.mrf.mxu0
  %v289 = vadd.f32 %v69, %v288
  %290 = vmatmul.f32.gmra.mxu0 %v124
  %v291 = vpop.f32.mrf.mxu0
  %v292 = vadd.f32 %v69, %v291
  %293 = vmatmul.f32.gmra.mxu0 %v127
  %v294 = vpop.f32.mrf.mxu0
  %v295 = vadd.f32 %v69, %v294
  %296 = vmatmul.f32.gmra.mxu0 %v130
  %v297 = vpop.f32.mrf.mxu0
  %v298 = vadd.f32 %v69, %v297
  %299 = vmatmul.f32.gmra.mxu0 %v133
  %v300 = vpop.f32.mrf.mxu0
  %v301 = vadd.f32 %v69, %v300
  %302 = vmatmul.f32.gmra.mxu0 %v136
  %v303 = vpop.f32.mrf.mxu0
  %v304 = vadd.f32 %v69, %v303
  %305 = vmatmul.f32.gmra.mxu0 %v139
  %v306 = vpop.f32.mrf.mxu0
  %v307 = vadd.f32 %v69, %v306
  %308 = vmatmul.f32.gmra.mxu0 %v142
  %v309 = vpop.f32.mrf.mxu0
  %v310 = vadd.f32 %v69, %v309
  %311 = vmatmul.f32.gmra.mxu0 %v145
  %v312 = vpop.f32.mrf.mxu0
  %v313 = vadd.f32 %v69, %v312
  %314 = vmatmul.f32.gmra.mxu0 %v148
  %v315 = vpop.f32.mrf.mxu0
  %v316 = vadd.f32 %v69, %v315
  %317 = vmatmul.f32.gmra.mxu0 %v151
  %v318 = vpop.f32.mrf.mxu0
  %v319 = vadd.f32 %v69, %v318
  %320 = vmatmul.f32.gmra.mxu0 %v154
  %v321 = vpop.f32.mrf.mxu0
  %v322 = vadd.f32 %v69, %v321
  %323 = vmatmul.f32.gmra.mxu0 %v157
  %v324 = vpop.f32.mrf.mxu0
  %v325 = vadd.f32 %v69, %v324
  %326 = vmatmul.f32.gmra.mxu0 %v160
  %v327 = vpop.f32.mrf.mxu0
  %v328 = vadd.f32 %v69, %v327
  %329 = vmatmul.f32.gmra.mxu0 %v163
  %v330 = vpop.f32.mrf.mxu0
  %v331 = vadd.f32 %v69, %v330
  %332 = vmatmul.f32.gmra.mxu0 %v166
  %v333 = vpop.f32.mrf.mxu0
  %v334 = vadd.f32 %v69, %v333
  %335 = vmatmul.f32.gmra.mxu0 %v169
  %v336 = vpop.f32.mrf.mxu0
  %v337 = vadd.f32 %v69, %v336
  %338 = vmatmul.f32.gmra.mxu0 %v172
  %v339 = vpop.f32.mrf.mxu0
  %v340 = vadd.f32 %v69, %v339
  %341 = vmatmul.f32.gmra.mxu0 %v175
  %v342 = vpop.f32.mrf.mxu0
  %v343 = vadd.f32 %v69, %v342
  %344 = vmatmul.f32.gmra.mxu0 %v178
  %v345 = vpop.f32.mrf.mxu0
  %v346 = vadd.f32 %v69, %v345
  %347 = vmatmul.f32.gmra.mxu0 %v181
  %v348 = vpop.f32.mrf.mxu0
  %v349 = vadd.f32 %v69, %v348
  %350 = vmatmul.f32.gmra.mxu0 %v184
  %v351 = vpop.f32.mrf.mxu0
  %v352 = vadd.f32 %v69, %v351
  %353 = vmatmul.f32.gmra.mxu0 %v187
  %v354 = vpop.f32.mrf.mxu0
  %v355 = vadd.f32 %v69, %v354
  %356 = vmatmul.f32.gmra.mxu0 %v190
  %v357 = vpop.f32.mrf.mxu0
  %v358 = vadd.f32 %v69, %v357
  %359 = vmatmul.f32.gmra.mxu0 %v193
  %v360 = vpop.f32.mrf.mxu0
  %v361 = vadd.f32 %v69, %v360
  %362 = vmatmul.f32.gmra.mxu0 %v196
  %v363 = vpop.f32.mrf.mxu0
  %v364 = vadd.f32 %v69, %v363
  %365 = vmatmul.f32.gmra.mxu0 %v199
  %v366 = vpop.f32.mrf.mxu0
  %v367 = vadd.f32 %v69, %v366
  %368 = vmatmul.f32.gmra.mxu0 %v202
  %v369 = vpop.f32.mrf.mxu0
  %v370 = vadd.f32 %v69, %v369
  %371 = vmatmul.f32.gmra.mxu0 %v205
  %v372 = vpop.f32.mrf.mxu0
  %v373 = vadd.f32 %v69, %v372
  %374 = vmatmul.f32.gmra.mxu0 %v208
  %v375 = vpop.f32.mrf.mxu0
  %v376 = vadd.f32 %v69, %v375
  %377 = vmatmul.f32.gmra.mxu0 %v211
  %v378 = vpop.f32.mrf.mxu0
  %v379 = vadd.f32 %v69, %v378
  %380 = vmatmul.f32.gmra.mxu0 %v214
  %v381 = vpop.f32.mrf.mxu0
  %v382 = vadd.f32 %v69, %v381
  %383 = vmatmul.f32.gmra.mxu0 %v217
  %v384 = vpop.f32.mrf.mxu0
  %v385 = vadd.f32 %v69, %v384
  %386 = vdwg.mxu0
  %s387 = scalar_lea.vmem %s0, 392
  %v388 = vld [vmem:[%s387] sm:$0xff]
  %v389 = vld [vmem:[%s387 + $0x8] sm:$0xff]
  %v390 = vld [vmem:[%s387 + $0x10] sm:$0xff]
  %v391 = vld [vmem:[%s387 + $0x18] sm:$0xff]
  %v392 = vld [vmem:[%s387 + $0x20] sm:$0xff]
  %v393 = vld [vmem:[%s387 + $0x28] sm:$0xff]
  %v394 = vld [vmem:[%s387 + $0x30] sm:$0xff]
  %v395 = vld [vmem:[%s387 + $0x38] sm:$0xff]
  %v396 = vld [vmem:[%s387 + $0x40] sm:$0xff]
  %v397 = vld [vmem:[%s387 + $0x48] sm:$0xff]
  %v398 = vld [vmem:[%s387 + $0x50] sm:$0xff]
  %v399 = vld [vmem:[%s387 + $0x58] sm:$0xff]
  %v400 = vld [vmem:[%s387 + $0x60] sm:$0xff]
  %v401 = vld [vmem:[%s387 + $0x68] sm:$0xff]
  %v402 = vld [vmem:[%s387 + $0x70] sm:$0xff]
  %v403 = vld [vmem:[%s387 + $0x78] sm:$0xff]
  %v404 = vld [vmem:[%s387 + $0x80] sm:$0xff]
  %v405 = vld [vmem:[%s387 + $0x88] sm:$0xff]
  %v406 = vld [vmem:[%s387 + $0x90] sm:$0xff]
  %v407 = vld [vmem:[%s387 + $0x98] sm:$0xff]
  %v408 = vld [vmem:[%s387 + $0xa0] sm:$0xff]
  %v409 = vld [vmem:[%s387 + $0xa8] sm:$0xff]
  %v410 = vld [vmem:[%s387 + $0xb0] sm:$0xff]
  %v411 = vld [vmem:[%s387 + $0xb8] sm:$0xff]
  %v412 = vld [vmem:[%s387 + $0xc0] sm:$0xff]
  %v413 = vld [vmem:[%s387 + $0xc8] sm:$0xff]
  %v414 = vld [vmem:[%s387 + $0xd0] sm:$0xff]
  %v415 = vld [vmem:[%s387 + $0xd8] sm:$0xff]
  %v416 = vld [vmem:[%s387 + $0xe0] sm:$0xff]
  %v417 = vld [vmem:[%s387 + $0xe8] sm:$0xff]
  %v418 = vld [vmem:[%s387 + $0xf0] sm:$0xff]
  %v419 = vld [vmem:[%s387 + $0xf8] sm:$0xff]
  %v420 = vld [vmem:[%s387 + $0x100] sm:$0xff]
  %v421 = vld [vmem:[%s387 + $0x108] sm:$0xff]
  %v422 = vld [vmem:[%s387 + $0x110] sm:$0xff]
  %v423 = vld [vmem:[%s387 + $0x118] sm:$0xff]
  %v424 = vld [vmem:[%s387 + $0x120] sm:$0xff]
  %v425 = vld [vmem:[%s387 + $0x128] sm:$0xff]
  %v426 = vld [vmem:[%s387 + $0x130] sm:$0xff]
  %v427 = vld [vmem:[%s387 + $0x138] sm:$0xff]
  %v428 = vld [vmem:[%s387 + $0x140] sm:$0xff]
  %v429 = vld [vmem:[%s387 + $0x148] sm:$0xff]
  %v430 = vld [vmem:[%s387 + $0x150] sm:$0xff]
  %v431 = vld [vmem:[%s387 + $0x158] sm:$0xff]
  %v432 = vld [vmem:[%s387 + $0x160] sm:$0xff]
  %v433 = vld [vmem:[%s387 + $0x168] sm:$0xff]
  %v434 = vld [vmem:[%s387 + $0x170] sm:$0xff]
  %v435 = vld [vmem:[%s387 + $0x178] sm:$0xff]
  %v436 = vld [vmem:[%s387 + $0x180] sm:$0xff]
  %v438 = vsel %vm71, %v388, 0
  %v441 = vsel %vm71, %v389, 0
  %v444 = vsel %vm71, %v390, 0
  %v447 = vsel %vm71, %v391, 0
  %v450 = vsel %vm71, %v392, 0
  %v453 = vsel %vm71, %v393, 0
  %v456 = vsel %vm71, %v394, 0
  %v459 = vsel %vm71, %v395, 0
  %v462 = vsel %vm71, %v396, 0
  %v465 = vsel %vm71, %v397, 0
  %v468 = vsel %vm71, %v398, 0
  %v471 = vsel %vm71, %v399, 0
  %v474 = vsel %vm71, %v400, 0
  %v477 = vsel %vm71, %v401, 0
  %v480 = vsel %vm71, %v402, 0
  %v483 = vsel %vm71, %v403, 0
  %v486 = vsel %vm71, %v404, 0
  %v489 = vsel %vm71, %v405, 0
  %v492 = vsel %vm71, %v406, 0
  %v495 = vsel %vm71, %v407, 0
  %v498 = vsel %vm71, %v408, 0
  %v501 = vsel %vm71, %v409, 0
  %v504 = vsel %vm71, %v410, 0
  %v507 = vsel %vm71, %v411, 0
  %v510 = vsel %vm71, %v412, 0
  %v513 = vsel %vm71, %v413, 0
  %v516 = vsel %vm71, %v414, 0
  %v519 = vsel %vm71, %v415, 0
  %v522 = vsel %vm71, %v416, 0
  %v525 = vsel %vm71, %v417, 0
  %v528 = vsel %vm71, %v418, 0
  %v531 = vsel %vm71, %v419, 0
  %v534 = vsel %vm71, %v420, 0
  %v537 = vsel %vm71, %v421, 0
  %v540 = vsel %vm71, %v422, 0
  %v543 = vsel %vm71, %v423, 0
  %v546 = vsel %vm71, %v424, 0
  %v549 = vsel %vm71, %v425, 0
  %v552 = vsel %vm71, %v426, 0
  %v555 = vsel %vm71, %v427, 0
  %v558 = vsel %vm71, %v428, 0
  %v561 = vsel %vm71, %v429, 0
  %v564 = vsel %vm71, %v430, 0
  %v567 = vsel %vm71, %v431, 0
  %v570 = vsel %vm71, %v432, 0
  %v573 = vsel %vm71, %v433, 0
  %v576 = vsel %vm71, %v434, 0
  %v579 = vsel %vm71, %v435, 0
  %v582 = vsel %vm71, %v436, 0
  %584 = vmatpush.msra.mxu0 0.0
  %585 = vmatpush.msra.mxu0 0.0
  %586 = vmatpush.msra.mxu0 0.0
  %587 = vmatpush.msra.mxu0 0.0
  %588 = vmatpush.msra.mxu0 0.0
  %589 = vmatpush.msra.mxu0 0.0
  %590 = vmatpush.msra.mxu0 0.0
  %591 = vmatpush.msra.mxu0 0.0
  %592 = vmatpush.msra.mxu0 0.0
  %593 = vmatpush.msra.mxu0 0.0
  %594 = vmatpush.msra.mxu0 0.0
  %595 = vmatpush.msra.mxu0 0.0
  %596 = vmatpush.msra.mxu0 %v221
  %597 = vmatpush.msra.mxu0 %v16
  %598 = vmatpush.msra.mxu0 %v15
  %599 = vmatpush.msra.mxu0 %v14
  %600 = vmatmul.f32.gmra.mxu0 %v438
  %v601 = vpop.f32.mrf.mxu0
  %v602 = vadd.f32 %v69, %v601
  %603 = vmatmul.f32.gmra.mxu0 %v441
  %v604 = vpop.f32.mrf.mxu0
  %v605 = vadd.f32 %v69, %v604
  %606 = vmatmul.f32.gmra.mxu0 %v444
  %v607 = vpop.f32.mrf.mxu0
  %v608 = vadd.f32 %v69, %v607
  %609 = vmatmul.f32.gmra.mxu0 %v447
  %v610 = vpop.f32.mrf.mxu0
  %v611 = vadd.f32 %v69, %v610
  %612 = vmatmul.f32.gmra.mxu0 %v450
  %v613 = vpop.f32.mrf.mxu0
  %v614 = vadd.f32 %v69, %v613
  %615 = vmatmul.f32.gmra.mxu0 %v453
  %v616 = vpop.f32.mrf.mxu0
  %v617 = vadd.f32 %v69, %v616
  %618 = vmatmul.f32.gmra.mxu0 %v456
  %v619 = vpop.f32.mrf.mxu0
  %v620 = vadd.f32 %v69, %v619
  %621 = vmatmul.f32.gmra.mxu0 %v459
  %v622 = vpop.f32.mrf.mxu0
  %v623 = vadd.f32 %v69, %v622
  %624 = vmatmul.f32.gmra.mxu0 %v462
  %v625 = vpop.f32.mrf.mxu0
  %v626 = vadd.f32 %v69, %v625
  %627 = vmatmul.f32.gmra.mxu0 %v465
  %v628 = vpop.f32.mrf.mxu0
  %v629 = vadd.f32 %v69, %v628
  %630 = vmatmul.f32.gmra.mxu0 %v468
  %v631 = vpop.f32.mrf.mxu0
  %v632 = vadd.f32 %v69, %v631
  %633 = vmatmul.f32.gmra.mxu0 %v471
  %v634 = vpop.f32.mrf.mxu0
  %v635 = vadd.f32 %v69, %v634
  %636 = vmatmul.f32.gmra.mxu0 %v474
  %v637 = vpop.f32.mrf.mxu0
  %v638 = vadd.f32 %v69, %v637
  %639 = vmatmul.f32.gmra.mxu0 %v477
  %v640 = vpop.f32.mrf.mxu0
  %v641 = vadd.f32 %v69, %v640
  %642 = vmatmul.f32.gmra.mxu0 %v480
  %v643 = vpop.f32.mrf.mxu0
  %v644 = vadd.f32 %v69, %v643
  %645 = vmatmul.f32.gmra.mxu0 %v483
  %v646 = vpop.f32.mrf.mxu0
  %v647 = vadd.f32 %v69, %v646
  %648 = vmatmul.f32.gmra.mxu0 %v486
  %v649 = vpop.f32.mrf.mxu0
  %v650 = vadd.f32 %v69, %v649
  %651 = vmatmul.f32.gmra.mxu0 %v489
  %v652 = vpop.f32.mrf.mxu0
  %v653 = vadd.f32 %v69, %v652
  %654 = vmatmul.f32.gmra.mxu0 %v492
  %v655 = vpop.f32.mrf.mxu0
  %v656 = vadd.f32 %v69, %v655
  %657 = vmatmul.f32.gmra.mxu0 %v495
  %v658 = vpop.f32.mrf.mxu0
  %v659 = vadd.f32 %v69, %v658
  %660 = vmatmul.f32.gmra.mxu0 %v498
  %v661 = vpop.f32.mrf.mxu0
  %v662 = vadd.f32 %v69, %v661
  %663 = vmatmul.f32.gmra.mxu0 %v501
  %v664 = vpop.f32.mrf.mxu0
  %v665 = vadd.f32 %v69, %v664
  %666 = vmatmul.f32.gmra.mxu0 %v504
  %v667 = vpop.f32.mrf.mxu0
  %v668 = vadd.f32 %v69, %v667
  %669 = vmatmul.f32.gmra.mxu0 %v507
  %v670 = vpop.f32.mrf.mxu0
  %v671 = vadd.f32 %v69, %v670
  %672 = vmatmul.f32.gmra.mxu0 %v510
  %v673 = vpop.f32.mrf.mxu0
  %v674 = vadd.f32 %v69, %v673
  %675 = vmatmul.f32.gmra.mxu0 %v513
  %v676 = vpop.f32.mrf.mxu0
  %v677 = vadd.f32 %v69, %v676
  %678 = vmatmul.f32.gmra.mxu0 %v516
  %v679 = vpop.f32.mrf.mxu0
  %v680 = vadd.f32 %v69, %v679
  %681 = vmatmul.f32.gmra.mxu0 %v519
  %v682 = vpop.f32.mrf.mxu0
  %v683 = vadd.f32 %v69, %v682
  %684 = vmatmul.f32.gmra.mxu0 %v522
  %v685 = vpop.f32.mrf.mxu0
  %v686 = vadd.f32 %v69, %v685
  %687 = vmatmul.f32.gmra.mxu0 %v525
  %v688 = vpop.f32.mrf.mxu0
  %v689 = vadd.f32 %v69, %v688
  %690 = vmatmul.f32.gmra.mxu0 %v528
  %v691 = vpop.f32.mrf.mxu0
  %v692 = vadd.f32 %v69, %v691
  %693 = vmatmul.f32.gmra.mxu0 %v531
  %v694 = vpop.f32.mrf.mxu0
  %v695 = vadd.f32 %v69, %v694
  %696 = vmatmul.f32.gmra.mxu0 %v534
  %v697 = vpop.f32.mrf.mxu0
  %v698 = vadd.f32 %v69, %v697
  %699 = vmatmul.f32.gmra.mxu0 %v537
  %v700 = vpop.f32.mrf.mxu0
  %v701 = vadd.f32 %v69, %v700
  %702 = vmatmul.f32.gmra.mxu0 %v540
  %v703 = vpop.f32.mrf.mxu0
  %v704 = vadd.f32 %v69, %v703
  %705 = vmatmul.f32.gmra.mxu0 %v543
  %v706 = vpop.f32.mrf.mxu0
  %v707 = vadd.f32 %v69, %v706
  %708 = vmatmul.f32.gmra.mxu0 %v546
  %v709 = vpop.f32.mrf.mxu0
  %v710 = vadd.f32 %v69, %v709
  %711 = vmatmul.f32.gmra.mxu0 %v549
  %v712 = vpop.f32.mrf.mxu0
  %v713 = vadd.f32 %v69, %v712
  %714 = vmatmul.f32.gmra.mxu0 %v552
  %v715 = vpop.f32.mrf.mxu0
  %v716 = vadd.f32 %v69, %v715
  %717 = vmatmul.f32.gmra.mxu0 %v555
  %v718 = vpop.f32.mrf.mxu0
  %v719 = vadd.f32 %v69, %v718
  %720 = vmatmul.f32.gmra.mxu0 %v558
  %v721 = vpop.f32.mrf.mxu0
  %v722 = vadd.f32 %v69, %v721
  %723 = vmatmul.f32.gmra.mxu0 %v561
  %v724 = vpop.f32.mrf.mxu0
  %v725 = vadd.f32 %v69, %v724
  %726 = vmatmul.f32.gmra.mxu0 %v564
  %v727 = vpop.f32.mrf.mxu0
  %v728 = vadd.f32 %v69, %v727
  %729 = vmatmul.f32.gmra.mxu0 %v567
  %v730 = vpop.f32.mrf.mxu0
  %v731 = vadd.f32 %v69, %v730
  %732 = vmatmul.f32.gmra.mxu0 %v570
  %v733 = vpop.f32.mrf.mxu0
  %v734 = vadd.f32 %v69, %v733
  %735 = vmatmul.f32.gmra.mxu0 %v573
  %v736 = vpop.f32.mrf.mxu0
  %v737 = vadd.f32 %v69, %v736
  %738 = vmatmul.f32.gmra.mxu0 %v576
  %v739 = vpop.f32.mrf.mxu0
  %v740 = vadd.f32 %v69, %v739
  %741 = vmatmul.f32.gmra.mxu0 %v579
  %v742 = vpop.f32.mrf.mxu0
  %v743 = vadd.f32 %v69, %v742
  %744 = vmatmul.f32.gmra.mxu0 %v582
  %v745 = vpop.f32.mrf.mxu0
  %v746 = vadd.f32 %v69, %v745
  %747 = vdwg.mxu0
  %v748 = vmax.f32 %v241, %v602
  %v749 = vmax.f32 %v244, %v605
  %v750 = vmax.f32 %v247, %v608
  %v751 = vmax.f32 %v250, %v611
  %v752 = vmax.f32 %v253, %v614
  %v753 = vmax.f32 %v256, %v617
  %v754 = vmax.f32 %v259, %v620
  %v755 = vmax.f32 %v262, %v623
  %v756 = vmax.f32 %v265, %v626
  %v757 = vmax.f32 %v268, %v629
  %v758 = vmax.f32 %v271, %v632
  %v759 = vmax.f32 %v274, %v635
  %v760 = vmax.f32 %v277, %v638
  %v761 = vmax.f32 %v280, %v641
  %v762 = vmax.f32 %v283, %v644
  %v763 = vmax.f32 %v286, %v647
  %v764 = vmax.f32 %v289, %v650
  %v765 = vmax.f32 %v292, %v653
  %v766 = vmax.f32 %v295, %v656
  %v767 = vmax.f32 %v298, %v659
  %v768 = vmax.f32 %v301, %v662
  %v769 = vmax.f32 %v304, %v665
  %v770 = vmax.f32 %v307, %v668
  %v771 = vmax.f32 %v310, %v671
  %v772 = vmax.f32 %v313, %v674
  %v773 = vmax.f32 %v316, %v677
  %v774 = vmax.f32 %v319, %v680
  %v775 = vmax.f32 %v322, %v683
  %v776 = vmax.f32 %v325, %v686
  %v777 = vmax.f32 %v328, %v689
  %v778 = vmax.f32 %v331, %v692
  %v779 = vmax.f32 %v334, %v695
  %v780 = vmax.f32 %v337, %v698
  %v781 = vmax.f32 %v340, %v701
  %v782 = vmax.f32 %v343, %v704
  %v783 = vmax.f32 %v346, %v707
  %v784 = vmax.f32 %v349, %v710
  %v785 = vmax.f32 %v352, %v713
  %v786 = vmax.f32 %v355, %v716
  %v787 = vmax.f32 %v358, %v719
  %v788 = vmax.f32 %v361, %v722
  %v789 = vmax.f32 %v364, %v725
  %v790 = vmax.f32 %v367, %v728
  %v791 = vmax.f32 %v370, %v731
  %v792 = vmax.f32 %v373, %v734
  %v793 = vmax.f32 %v376, %v737
  %v794 = vmax.f32 %v379, %v740
  %v795 = vmax.f32 %v382, %v743
  %v796 = vmax.f32 %v385, %v746
  %s797 = scalar_lea.vmem %s0, 784
  %v798 = vld [vmem:[%s797] sm:$0xff]
  %v799 = vld [vmem:[%s797 + $0x8] sm:$0xff]
  %v800 = vld [vmem:[%s797 + $0x10] sm:$0xff]
  %v801 = vld [vmem:[%s797 + $0x18] sm:$0xff]
  %v802 = vld [vmem:[%s797 + $0x20] sm:$0xff]
  %v803 = vld [vmem:[%s797 + $0x28] sm:$0xff]
  %v804 = vld [vmem:[%s797 + $0x30] sm:$0xff]
  %v805 = vld [vmem:[%s797 + $0x38] sm:$0xff]
  %v806 = vld [vmem:[%s797 + $0x40] sm:$0xff]
  %v807 = vld [vmem:[%s797 + $0x48] sm:$0xff]
  %v808 = vld [vmem:[%s797 + $0x50] sm:$0xff]
  %v809 = vld [vmem:[%s797 + $0x58] sm:$0xff]
  %v810 = vld [vmem:[%s797 + $0x60] sm:$0xff]
  %v811 = vld [vmem:[%s797 + $0x68] sm:$0xff]
  %v812 = vld [vmem:[%s797 + $0x70] sm:$0xff]
  %v813 = vld [vmem:[%s797 + $0x78] sm:$0xff]
  %v814 = vld [vmem:[%s797 + $0x80] sm:$0xff]
  %v815 = vld [vmem:[%s797 + $0x88] sm:$0xff]
  %v816 = vld [vmem:[%s797 + $0x90] sm:$0xff]
  %v817 = vld [vmem:[%s797 + $0x98] sm:$0xff]
  %v818 = vld [vmem:[%s797 + $0xa0] sm:$0xff]
  %v819 = vld [vmem:[%s797 + $0xa8] sm:$0xff]
  %v820 = vld [vmem:[%s797 + $0xb0] sm:$0xff]
  %v821 = vld [vmem:[%s797 + $0xb8] sm:$0xff]
  %v822 = vld [vmem:[%s797 + $0xc0] sm:$0xff]
  %v823 = vld [vmem:[%s797 + $0xc8] sm:$0xff]
  %v824 = vld [vmem:[%s797 + $0xd0] sm:$0xff]
  %v825 = vld [vmem:[%s797 + $0xd8] sm:$0xff]
  %v826 = vld [vmem:[%s797 + $0xe0] sm:$0xff]
  %v827 = vld [vmem:[%s797 + $0xe8] sm:$0xff]
  %v828 = vld [vmem:[%s797 + $0xf0] sm:$0xff]
  %v829 = vld [vmem:[%s797 + $0xf8] sm:$0xff]
  %v830 = vld [vmem:[%s797 + $0x100] sm:$0xff]
  %v831 = vld [vmem:[%s797 + $0x108] sm:$0xff]
  %v832 = vld [vmem:[%s797 + $0x110] sm:$0xff]
  %v833 = vld [vmem:[%s797 + $0x118] sm:$0xff]
  %v834 = vld [vmem:[%s797 + $0x120] sm:$0xff]
  %v835 = vld [vmem:[%s797 + $0x128] sm:$0xff]
  %v836 = vld [vmem:[%s797 + $0x130] sm:$0xff]
  %v837 = vld [vmem:[%s797 + $0x138] sm:$0xff]
  %v838 = vld [vmem:[%s797 + $0x140] sm:$0xff]
  %v839 = vld [vmem:[%s797 + $0x148] sm:$0xff]
  %v840 = vld [vmem:[%s797 + $0x150] sm:$0xff]
  %v841 = vld [vmem:[%s797 + $0x158] sm:$0xff]
  %v842 = vld [vmem:[%s797 + $0x160] sm:$0xff]
  %v843 = vld [vmem:[%s797 + $0x168] sm:$0xff]
  %v844 = vld [vmem:[%s797 + $0x170] sm:$0xff]
  %v845 = vld [vmem:[%s797 + $0x178] sm:$0xff]
  %v846 = vld [vmem:[%s797 + $0x180] sm:$0xff]
  %v848 = vsel %vm71, %v798, 0
  %v851 = vsel %vm71, %v799, 0
  %v854 = vsel %vm71, %v800, 0
  %v857 = vsel %vm71, %v801, 0
  %v860 = vsel %vm71, %v802, 0
  %v863 = vsel %vm71, %v803, 0
  %v866 = vsel %vm71, %v804, 0
  %v869 = vsel %vm71, %v805, 0
  %v872 = vsel %vm71, %v806, 0
  %v875 = vsel %vm71, %v807, 0
  %v878 = vsel %vm71, %v808, 0
  %v881 = vsel %vm71, %v809, 0
  %v884 = vsel %vm71, %v810, 0
  %v887 = vsel %vm71, %v811, 0
  %v890 = vsel %vm71, %v812, 0
  %v893 = vsel %vm71, %v813, 0
  %v896 = vsel %vm71, %v814, 0
  %v899 = vsel %vm71, %v815, 0
  %v902 = vsel %vm71, %v816, 0
  %v905 = vsel %vm71, %v817, 0
  %v908 = vsel %vm71, %v818, 0
  %v911 = vsel %vm71, %v819, 0
  %v914 = vsel %vm71, %v820, 0
  %v917 = vsel %vm71, %v821, 0
  %v920 = vsel %vm71, %v822, 0
  %v923 = vsel %vm71, %v823, 0
  %v926 = vsel %vm71, %v824, 0
  %v929 = vsel %vm71, %v825, 0
  %v932 = vsel %vm71, %v826, 0
  %v935 = vsel %vm71, %v827, 0
  %v938 = vsel %vm71, %v828, 0
  %v941 = vsel %vm71, %v829, 0
  %v944 = vsel %vm71, %v830, 0
  %v947 = vsel %vm71, %v831, 0
  %v950 = vsel %vm71, %v832, 0
  %v953 = vsel %vm71, %v833, 0
  %v956 = vsel %vm71, %v834, 0
  %v959 = vsel %vm71, %v835, 0
  %v962 = vsel %vm71, %v836, 0
  %v965 = vsel %vm71, %v837, 0
  %v968 = vsel %vm71, %v838, 0
  %v971 = vsel %vm71, %v839, 0
  %v974 = vsel %vm71, %v840, 0
  %v977 = vsel %vm71, %v841, 0
  %v980 = vsel %vm71, %v842, 0
  %v983 = vsel %vm71, %v843, 0
  %v986 = vsel %vm71, %v844, 0
  %v989 = vsel %vm71, %v845, 0
  %v992 = vsel %vm71, %v846, 0
  %994 = vmatpush.msra.mxu0 0.0
  %995 = vmatpush.msra.mxu0 0.0
  %996 = vmatpush.msra.mxu0 0.0
  %997 = vmatpush.msra.mxu0 0.0
  %998 = vmatpush.msra.mxu0 0.0
  %999 = vmatpush.msra.mxu0 0.0
  %1000 = vmatpush.msra.mxu0 0.0
  %1001 = vmatpush.msra.mxu0 0.0
  %1002 = vmatpush.msra.mxu0 0.0
  %1003 = vmatpush.msra.mxu0 0.0
  %1004 = vmatpush.msra.mxu0 0.0
  %1005 = vmatpush.msra.mxu0 0.0
  %1006 = vmatpush.msra.mxu0 %v221
  %1007 = vmatpush.msra.mxu0 %v16
  %1008 = vmatpush.msra.mxu0 %v15
  %1009 = vmatpush.msra.mxu0 %v14
  %1010 = vmatmul.f32.gmra.mxu0 %v848
  %v1011 = vpop.f32.mrf.mxu0
  %v1012 = vadd.f32 %v69, %v1011
  %1013 = vmatmul.f32.gmra.mxu0 %v851
  %v1014 = vpop.f32.mrf.mxu0
  %v1015 = vadd.f32 %v69, %v1014
  %1016 = vmatmul.f32.gmra.mxu0 %v854
  %v1017 = vpop.f32.mrf.mxu0
  %v1018 = vadd.f32 %v69, %v1017
  %1019 = vmatmul.f32.gmra.mxu0 %v857
  %v1020 = vpop.f32.mrf.mxu0
  %v1021 = vadd.f32 %v69, %v1020
  %1022 = vmatmul.f32.gmra.mxu0 %v860
  %v1023 = vpop.f32.mrf.mxu0
  %v1024 = vadd.f32 %v69, %v1023
  %1025 = vmatmul.f32.gmra.mxu0 %v863
  %v1026 = vpop.f32.mrf.mxu0
  %v1027 = vadd.f32 %v69, %v1026
  %1028 = vmatmul.f32.gmra.mxu0 %v866
  %v1029 = vpop.f32.mrf.mxu0
  %v1030 = vadd.f32 %v69, %v1029
  %1031 = vmatmul.f32.gmra.mxu0 %v869
  %v1032 = vpop.f32.mrf.mxu0
  %v1033 = vadd.f32 %v69, %v1032
  %1034 = vmatmul.f32.gmra.mxu0 %v872
  %v1035 = vpop.f32.mrf.mxu0
  %v1036 = vadd.f32 %v69, %v1035
  %1037 = vmatmul.f32.gmra.mxu0 %v875
  %v1038 = vpop.f32.mrf.mxu0
  %v1039 = vadd.f32 %v69, %v1038
  %1040 = vmatmul.f32.gmra.mxu0 %v878
  %v1041 = vpop.f32.mrf.mxu0
  %v1042 = vadd.f32 %v69, %v1041
  %1043 = vmatmul.f32.gmra.mxu0 %v881
  %v1044 = vpop.f32.mrf.mxu0
  %v1045 = vadd.f32 %v69, %v1044
  %1046 = vmatmul.f32.gmra.mxu0 %v884
  %v1047 = vpop.f32.mrf.mxu0
  %v1048 = vadd.f32 %v69, %v1047
  %1049 = vmatmul.f32.gmra.mxu0 %v887
  %v1050 = vpop.f32.mrf.mxu0
  %v1051 = vadd.f32 %v69, %v1050
  %1052 = vmatmul.f32.gmra.mxu0 %v890
  %v1053 = vpop.f32.mrf.mxu0
  %v1054 = vadd.f32 %v69, %v1053
  %1055 = vmatmul.f32.gmra.mxu0 %v893
  %v1056 = vpop.f32.mrf.mxu0
  %v1057 = vadd.f32 %v69, %v1056
  %1058 = vmatmul.f32.gmra.mxu0 %v896
  %v1059 = vpop.f32.mrf.mxu0
  %v1060 = vadd.f32 %v69, %v1059
  %1061 = vmatmul.f32.gmra.mxu0 %v899
  %v1062 = vpop.f32.mrf.mxu0
  %v1063 = vadd.f32 %v69, %v1062
  %1064 = vmatmul.f32.gmra.mxu0 %v902
  %v1065 = vpop.f32.mrf.mxu0
  %v1066 = vadd.f32 %v69, %v1065
  %1067 = vmatmul.f32.gmra.mxu0 %v905
  %v1068 = vpop.f32.mrf.mxu0
  %v1069 = vadd.f32 %v69, %v1068
  %1070 = vmatmul.f32.gmra.mxu0 %v908
  %v1071 = vpop.f32.mrf.mxu0
  %v1072 = vadd.f32 %v69, %v1071
  %1073 = vmatmul.f32.gmra.mxu0 %v911
  %v1074 = vpop.f32.mrf.mxu0
  %v1075 = vadd.f32 %v69, %v1074
  %1076 = vmatmul.f32.gmra.mxu0 %v914
  %v1077 = vpop.f32.mrf.mxu0
  %v1078 = vadd.f32 %v69, %v1077
  %1079 = vmatmul.f32.gmra.mxu0 %v917
  %v1080 = vpop.f32.mrf.mxu0
  %v1081 = vadd.f32 %v69, %v1080
  %1082 = vmatmul.f32.gmra.mxu0 %v920
  %v1083 = vpop.f32.mrf.mxu0
  %v1084 = vadd.f32 %v69, %v1083
  %1085 = vmatmul.f32.gmra.mxu0 %v923
  %v1086 = vpop.f32.mrf.mxu0
  %v1087 = vadd.f32 %v69, %v1086
  %1088 = vmatmul.f32.gmra.mxu0 %v926
  %v1089 = vpop.f32.mrf.mxu0
  %v1090 = vadd.f32 %v69, %v1089
  %1091 = vmatmul.f32.gmra.mxu0 %v929
  %v1092 = vpop.f32.mrf.mxu0
  %v1093 = vadd.f32 %v69, %v1092
  %1094 = vmatmul.f32.gmra.mxu0 %v932
  %v1095 = vpop.f32.mrf.mxu0
  %v1096 = vadd.f32 %v69, %v1095
  %1097 = vmatmul.f32.gmra.mxu0 %v935
  %v1098 = vpop.f32.mrf.mxu0
  %v1099 = vadd.f32 %v69, %v1098
  %1100 = vmatmul.f32.gmra.mxu0 %v938
  %v1101 = vpop.f32.mrf.mxu0
  %v1102 = vadd.f32 %v69, %v1101
  %1103 = vmatmul.f32.gmra.mxu0 %v941
  %v1104 = vpop.f32.mrf.mxu0
  %v1105 = vadd.f32 %v69, %v1104
  %1106 = vmatmul.f32.gmra.mxu0 %v944
  %v1107 = vpop.f32.mrf.mxu0
  %v1108 = vadd.f32 %v69, %v1107
  %1109 = vmatmul.f32.gmra.mxu0 %v947
  %v1110 = vpop.f32.mrf.mxu0
  %v1111 = vadd.f32 %v69, %v1110
  %1112 = vmatmul.f32.gmra.mxu0 %v950
  %v1113 = vpop.f32.mrf.mxu0
  %v1114 = vadd.f32 %v69, %v1113
  %1115 = vmatmul.f32.gmra.mxu0 %v953
  %v1116 = vpop.f32.mrf.mxu0
  %v1117 = vadd.f32 %v69, %v1116
  %1118 = vmatmul.f32.gmra.mxu0 %v956
  %v1119 = vpop.f32.mrf.mxu0
  %v1120 = vadd.f32 %v69, %v1119
  %1121 = vmatmul.f32.gmra.mxu0 %v959
  %v1122 = vpop.f32.mrf.mxu0
  %v1123 = vadd.f32 %v69, %v1122
  %1124 = vmatmul.f32.gmra.mxu0 %v962
  %v1125 = vpop.f32.mrf.mxu0
  %v1126 = vadd.f32 %v69, %v1125
  %1127 = vmatmul.f32.gmra.mxu0 %v965
  %v1128 = vpop.f32.mrf.mxu0
  %v1129 = vadd.f32 %v69, %v1128
  %1130 = vmatmul.f32.gmra.mxu0 %v968
  %v1131 = vpop.f32.mrf.mxu0
  %v1132 = vadd.f32 %v69, %v1131
  %1133 = vmatmul.f32.gmra.mxu0 %v971
  %v1134 = vpop.f32.mrf.mxu0
  %v1135 = vadd.f32 %v69, %v1134
  %1136 = vmatmul.f32.gmra.mxu0 %v974
  %v1137 = vpop.f32.mrf.mxu0
  %v1138 = vadd.f32 %v69, %v1137
  %1139 = vmatmul.f32.gmra.mxu0 %v977
  %v1140 = vpop.f32.mrf.mxu0
  %v1141 = vadd.f32 %v69, %v1140
  %1142 = vmatmul.f32.gmra.mxu0 %v980
  %v1143 = vpop.f32.mrf.mxu0
  %v1144 = vadd.f32 %v69, %v1143
  %1145 = vmatmul.f32.gmra.mxu0 %v983
  %v1146 = vpop.f32.mrf.mxu0
  %v1147 = vadd.f32 %v69, %v1146
  %1148 = vmatmul.f32.gmra.mxu0 %v986
  %v1149 = vpop.f32.mrf.mxu0
  %v1150 = vadd.f32 %v69, %v1149
  %1151 = vmatmul.f32.gmra.mxu0 %v989
  %v1152 = vpop.f32.mrf.mxu0
  %v1153 = vadd.f32 %v69, %v1152
  %1154 = vmatmul.f32.gmra.mxu0 %v992
  %v1155 = vpop.f32.mrf.mxu0
  %v1156 = vadd.f32 %v69, %v1155
  %1157 = vdwg.mxu0
  %v1158 = vmax.f32 %v748, %v1012
  %v1159 = vmax.f32 %v749, %v1015
  %v1160 = vmax.f32 %v750, %v1018
  %v1161 = vmax.f32 %v751, %v1021
  %v1162 = vmax.f32 %v752, %v1024
  %v1163 = vmax.f32 %v753, %v1027
  %v1164 = vmax.f32 %v754, %v1030
  %v1165 = vmax.f32 %v755, %v1033
  %v1166 = vmax.f32 %v756, %v1036
  %v1167 = vmax.f32 %v757, %v1039
  %v1168 = vmax.f32 %v758, %v1042
  %v1169 = vmax.f32 %v759, %v1045
  %v1170 = vmax.f32 %v760, %v1048
  %v1171 = vmax.f32 %v761, %v1051
  %v1172 = vmax.f32 %v762, %v1054
  %v1173 = vmax.f32 %v763, %v1057
  %v1174 = vmax.f32 %v764, %v1060
  %v1175 = vmax.f32 %v765, %v1063
  %v1176 = vmax.f32 %v766, %v1066
  %v1177 = vmax.f32 %v767, %v1069
  %v1178 = vmax.f32 %v768, %v1072
  %v1179 = vmax.f32 %v769, %v1075
  %v1180 = vmax.f32 %v770, %v1078
  %v1181 = vmax.f32 %v771, %v1081
  %v1182 = vmax.f32 %v772, %v1084
  %v1183 = vmax.f32 %v773, %v1087
  %v1184 = vmax.f32 %v774, %v1090
  %v1185 = vmax.f32 %v775, %v1093
  %v1186 = vmax.f32 %v776, %v1096
  %v1187 = vmax.f32 %v777, %v1099
  %v1188 = vmax.f32 %v778, %v1102
  %v1189 = vmax.f32 %v779, %v1105
  %v1190 = vmax.f32 %v780, %v1108
  %v1191 = vmax.f32 %v781, %v1111
  %v1192 = vmax.f32 %v782, %v1114
  %v1193 = vmax.f32 %v783, %v1117
  %v1194 = vmax.f32 %v784, %v1120
  %v1195 = vmax.f32 %v785, %v1123
  %v1196 = vmax.f32 %v786, %v1126
  %v1197 = vmax.f32 %v787, %v1129
  %v1198 = vmax.f32 %v788, %v1132
  %v1199 = vmax.f32 %v789, %v1135
  %v1200 = vmax.f32 %v790, %v1138
  %v1201 = vmax.f32 %v791, %v1141
  %v1202 = vmax.f32 %v792, %v1144
  %v1203 = vmax.f32 %v793, %v1147
  %v1204 = vmax.f32 %v794, %v1150
  %v1205 = vmax.f32 %v795, %v1153
  %v1206 = vmax.f32 %v796, %v1156
  %s1207 = scalar_lea.vmem %s0, 1176
  %v1208 = vld [vmem:[%s1207] sm:$0xff]
  %v1209 = vld [vmem:[%s1207 + $0x8] sm:$0xff]
  %v1210 = vld [vmem:[%s1207 + $0x10] sm:$0xff]
  %v1211 = vld [vmem:[%s1207 + $0x18] sm:$0xff]
  %v1212 = vld [vmem:[%s1207 + $0x20] sm:$0xff]
  %v1213 = vld [vmem:[%s1207 + $0x28] sm:$0xff]
  %v1214 = vld [vmem:[%s1207 + $0x30] sm:$0xff]
  %v1215 = vld [vmem:[%s1207 + $0x38] sm:$0xff]
  %v1216 = vld [vmem:[%s1207 + $0x40] sm:$0xff]
  %v1217 = vld [vmem:[%s1207 + $0x48] sm:$0xff]
  %v1218 = vld [vmem:[%s1207 + $0x50] sm:$0xff]
  %v1219 = vld [vmem:[%s1207 + $0x58] sm:$0xff]
  %v1220 = vld [vmem:[%s1207 + $0x60] sm:$0xff]
  %v1221 = vld [vmem:[%s1207 + $0x68] sm:$0xff]
  %v1222 = vld [vmem:[%s1207 + $0x70] sm:$0xff]
  %v1223 = vld [vmem:[%s1207 + $0x78] sm:$0xff]
  %v1224 = vld [vmem:[%s1207 + $0x80] sm:$0xff]
  %v1225 = vld [vmem:[%s1207 + $0x88] sm:$0xff]
  %v1226 = vld [vmem:[%s1207 + $0x90] sm:$0xff]
  %v1227 = vld [vmem:[%s1207 + $0x98] sm:$0xff]
  %v1228 = vld [vmem:[%s1207 + $0xa0] sm:$0xff]
  %v1229 = vld [vmem:[%s1207 + $0xa8] sm:$0xff]
  %v1230 = vld [vmem:[%s1207 + $0xb0] sm:$0xff]
  %v1231 = vld [vmem:[%s1207 + $0xb8] sm:$0xff]
  %v1232 = vld [vmem:[%s1207 + $0xc0] sm:$0xff]
  %v1233 = vld [vmem:[%s1207 + $0xc8] sm:$0xff]
  %v1234 = vld [vmem:[%s1207 + $0xd0] sm:$0xff]
  %v1235 = vld [vmem:[%s1207 + $0xd8] sm:$0xff]
  %v1236 = vld [vmem:[%s1207 + $0xe0] sm:$0xff]
  %v1237 = vld [vmem:[%s1207 + $0xe8] sm:$0xff]
  %v1238 = vld [vmem:[%s1207 + $0xf0] sm:$0xff]
  %v1239 = vld [vmem:[%s1207 + $0xf8] sm:$0xff]
  %v1240 = vld [vmem:[%s1207 + $0x100] sm:$0xff]
  %v1241 = vld [vmem:[%s1207 + $0x108] sm:$0xff]
  %v1242 = vld [vmem:[%s1207 + $0x110] sm:$0xff]
  %v1243 = vld [vmem:[%s1207 + $0x118] sm:$0xff]
  %v1244 = vld [vmem:[%s1207 + $0x120] sm:$0xff]
  %v1245 = vld [vmem:[%s1207 + $0x128] sm:$0xff]
  %v1246 = vld [vmem:[%s1207 + $0x130] sm:$0xff]
  %v1247 = vld [vmem:[%s1207 + $0x138] sm:$0xff]
  %v1248 = vld [vmem:[%s1207 + $0x140] sm:$0xff]
  %v1249 = vld [vmem:[%s1207 + $0x148] sm:$0xff]
  %v1250 = vld [vmem:[%s1207 + $0x150] sm:$0xff]
  %v1251 = vld [vmem:[%s1207 + $0x158] sm:$0xff]
  %v1252 = vld [vmem:[%s1207 + $0x160] sm:$0xff]
  %v1253 = vld [vmem:[%s1207 + $0x168] sm:$0xff]
  %v1254 = vld [vmem:[%s1207 + $0x170] sm:$0xff]
  %v1255 = vld [vmem:[%s1207 + $0x178] sm:$0xff]
  %v1256 = vld [vmem:[%s1207 + $0x180] sm:$0xff]
  %v1258 = vsel %vm71, %v1208, 0
  %v1261 = vsel %vm71, %v1209, 0
  %v1264 = vsel %vm71, %v1210, 0
  %v1267 = vsel %vm71, %v1211, 0
  %v1270 = vsel %vm71, %v1212, 0
  %v1273 = vsel %vm71, %v1213, 0
  %v1276 = vsel %vm71, %v1214, 0
  %v1279 = vsel %vm71, %v1215, 0
  %v1282 = vsel %vm71, %v1216, 0
  %v1285 = vsel %vm71, %v1217, 0
  %v1288 = vsel %vm71, %v1218, 0
  %v1291 = vsel %vm71, %v1219, 0
  %v1294 = vsel %vm71, %v1220, 0
  %v1297 = vsel %vm71, %v1221, 0
  %v1300 = vsel %vm71, %v1222, 0
  %v1303 = vsel %vm71, %v1223, 0
  %v1306 = vsel %vm71, %v1224, 0
  %v1309 = vsel %vm71, %v1225, 0
  %v1312 = vsel %vm71, %v1226, 0
  %v1315 = vsel %vm71, %v1227, 0
  %v1318 = vsel %vm71, %v1228, 0
  %v1321 = vsel %vm71, %v1229, 0
  %v1324 = vsel %vm71, %v1230, 0
  %v1327 = vsel %vm71, %v1231, 0
  %v1330 = vsel %vm71, %v1232, 0
  %v1333 = vsel %vm71, %v1233, 0
  %v1336 = vsel %vm71, %v1234, 0
  %v1339 = vsel %vm71, %v1235, 0
  %v1342 = vsel %vm71, %v1236, 0
  %v1345 = vsel %vm71, %v1237, 0
  %v1348 = vsel %vm71, %v1238, 0
  %v1351 = vsel %vm71, %v1239, 0
  %v1354 = vsel %vm71, %v1240, 0
  %v1357 = vsel %vm71, %v1241, 0
  %v1360 = vsel %vm71, %v1242, 0
  %v1363 = vsel %vm71, %v1243, 0
  %v1366 = vsel %vm71, %v1244, 0
  %v1369 = vsel %vm71, %v1245, 0
  %v1372 = vsel %vm71, %v1246, 0
  %v1375 = vsel %vm71, %v1247, 0
  %v1378 = vsel %vm71, %v1248, 0
  %v1381 = vsel %vm71, %v1249, 0
  %v1384 = vsel %vm71, %v1250, 0
  %v1387 = vsel %vm71, %v1251, 0
  %v1390 = vsel %vm71, %v1252, 0
  %v1393 = vsel %vm71, %v1253, 0
  %v1396 = vsel %vm71, %v1254, 0
  %v1399 = vsel %vm71, %v1255, 0
  %v1402 = vsel %vm71, %v1256, 0
  %1404 = vmatpush.msra.mxu0 0.0
  %1405 = vmatpush.msra.mxu0 0.0
  %1406 = vmatpush.msra.mxu0 0.0
  %1407 = vmatpush.msra.mxu0 0.0
  %1408 = vmatpush.msra.mxu0 0.0
  %1409 = vmatpush.msra.mxu0 0.0
  %1410 = vmatpush.msra.mxu0 0.0
  %1411 = vmatpush.msra.mxu0 0.0
  %1412 = vmatpush.msra.mxu0 0.0
  %1413 = vmatpush.msra.mxu0 0.0
  %1414 = vmatpush.msra.mxu0 0.0
  %1415 = vmatpush.msra.mxu0 0.0
  %1416 = vmatpush.msra.mxu0 %v221
  %1417 = vmatpush.msra.mxu0 %v16
  %1418 = vmatpush.msra.mxu0 %v15
  %1419 = vmatpush.msra.mxu0 %v14
  %1420 = vmatmul.f32.gmra.mxu0 %v1258
  %v1421 = vpop.f32.mrf.mxu0
  %v1422 = vadd.f32 %v69, %v1421
  %1423 = vmatmul.f32.gmra.mxu0 %v1261
  %v1424 = vpop.f32.mrf.mxu0
  %v1425 = vadd.f32 %v69, %v1424
  %1426 = vmatmul.f32.gmra.mxu0 %v1264
  %v1427 = vpop.f32.mrf.mxu0
  %v1428 = vadd.f32 %v69, %v1427
  %1429 = vmatmul.f32.gmra.mxu0 %v1267
  %v1430 = vpop.f32.mrf.mxu0
  %v1431 = vadd.f32 %v69, %v1430
  %1432 = vmatmul.f32.gmra.mxu0 %v1270
  %v1433 = vpop.f32.mrf.mxu0
  %v1434 = vadd.f32 %v69, %v1433
  %1435 = vmatmul.f32.gmra.mxu0 %v1273
  %v1436 = vpop.f32.mrf.mxu0
  %v1437 = vadd.f32 %v69, %v1436
  %1438 = vmatmul.f32.gmra.mxu0 %v1276
  %v1439 = vpop.f32.mrf.mxu0
  %v1440 = vadd.f32 %v69, %v1439
  %1441 = vmatmul.f32.gmra.mxu0 %v1279
  %v1442 = vpop.f32.mrf.mxu0
  %v1443 = vadd.f32 %v69, %v1442
  %1444 = vmatmul.f32.gmra.mxu0 %v1282
  %v1445 = vpop.f32.mrf.mxu0
  %v1446 = vadd.f32 %v69, %v1445
  %1447 = vmatmul.f32.gmra.mxu0 %v1285
  %v1448 = vpop.f32.mrf.mxu0
  %v1449 = vadd.f32 %v69, %v1448
  %1450 = vmatmul.f32.gmra.mxu0 %v1288
  %v1451 = vpop.f32.mrf.mxu0
  %v1452 = vadd.f32 %v69, %v1451
  %1453 = vmatmul.f32.gmra.mxu0 %v1291
  %v1454 = vpop.f32.mrf.mxu0
  %v1455 = vadd.f32 %v69, %v1454
  %1456 = vmatmul.f32.gmra.mxu0 %v1294
  %v1457 = vpop.f32.mrf.mxu0
  %v1458 = vadd.f32 %v69, %v1457
  %1459 = vmatmul.f32.gmra.mxu0 %v1297
  %v1460 = vpop.f32.mrf.mxu0
  %v1461 = vadd.f32 %v69, %v1460
  %1462 = vmatmul.f32.gmra.mxu0 %v1300
  %v1463 = vpop.f32.mrf.mxu0
  %v1464 = vadd.f32 %v69, %v1463
  %1465 = vmatmul.f32.gmra.mxu0 %v1303
  %v1466 = vpop.f32.mrf.mxu0
  %v1467 = vadd.f32 %v69, %v1466
  %1468 = vmatmul.f32.gmra.mxu0 %v1306
  %v1469 = vpop.f32.mrf.mxu0
  %v1470 = vadd.f32 %v69, %v1469
  %1471 = vmatmul.f32.gmra.mxu0 %v1309
  %v1472 = vpop.f32.mrf.mxu0
  %v1473 = vadd.f32 %v69, %v1472
  %1474 = vmatmul.f32.gmra.mxu0 %v1312
  %v1475 = vpop.f32.mrf.mxu0
  %v1476 = vadd.f32 %v69, %v1475
  %1477 = vmatmul.f32.gmra.mxu0 %v1315
  %v1478 = vpop.f32.mrf.mxu0
  %v1479 = vadd.f32 %v69, %v1478
  %1480 = vmatmul.f32.gmra.mxu0 %v1318
  %v1481 = vpop.f32.mrf.mxu0
  %v1482 = vadd.f32 %v69, %v1481
  %1483 = vmatmul.f32.gmra.mxu0 %v1321
  %v1484 = vpop.f32.mrf.mxu0
  %v1485 = vadd.f32 %v69, %v1484
  %1486 = vmatmul.f32.gmra.mxu0 %v1324
  %v1487 = vpop.f32.mrf.mxu0
  %v1488 = vadd.f32 %v69, %v1487
  %1489 = vmatmul.f32.gmra.mxu0 %v1327
  %v1490 = vpop.f32.mrf.mxu0
  %v1491 = vadd.f32 %v69, %v1490
  %1492 = vmatmul.f32.gmra.mxu0 %v1330
  %v1493 = vpop.f32.mrf.mxu0
  %v1494 = vadd.f32 %v69, %v1493
  %1495 = vmatmul.f32.gmra.mxu0 %v1333
  %v1496 = vpop.f32.mrf.mxu0
  %v1497 = vadd.f32 %v69, %v1496
  %1498 = vmatmul.f32.gmra.mxu0 %v1336
  %v1499 = vpop.f32.mrf.mxu0
  %v1500 = vadd.f32 %v69, %v1499
  %1501 = vmatmul.f32.gmra.mxu0 %v1339
  %v1502 = vpop.f32.mrf.mxu0
  %v1503 = vadd.f32 %v69, %v1502
  %1504 = vmatmul.f32.gmra.mxu0 %v1342
  %v1505 = vpop.f32.mrf.mxu0
  %v1506 = vadd.f32 %v69, %v1505
  %1507 = vmatmul.f32.gmra.mxu0 %v1345
  %v1508 = vpop.f32.mrf.mxu0
  %v1509 = vadd.f32 %v69, %v1508
  %1510 = vmatmul.f32.gmra.mxu0 %v1348
  %v1511 = vpop.f32.mrf.mxu0
  %v1512 = vadd.f32 %v69, %v1511
  %1513 = vmatmul.f32.gmra.mxu0 %v1351
  %v1514 = vpop.f32.mrf.mxu0
  %v1515 = vadd.f32 %v69, %v1514
  %1516 = vmatmul.f32.gmra.mxu0 %v1354
  %v1517 = vpop.f32.mrf.mxu0
  %v1518 = vadd.f32 %v69, %v1517
  %1519 = vmatmul.f32.gmra.mxu0 %v1357
  %v1520 = vpop.f32.mrf.mxu0
  %v1521 = vadd.f32 %v69, %v1520
  %1522 = vmatmul.f32.gmra.mxu0 %v1360
  %v1523 = vpop.f32.mrf.mxu0
  %v1524 = vadd.f32 %v69, %v1523
  %1525 = vmatmul.f32.gmra.mxu0 %v1363
  %v1526 = vpop.f32.mrf.mxu0
  %v1527 = vadd.f32 %v69, %v1526
  %1528 = vmatmul.f32.gmra.mxu0 %v1366
  %v1529 = vpop.f32.mrf.mxu0
  %v1530 = vadd.f32 %v69, %v1529
  %1531 = vmatmul.f32.gmra.mxu0 %v1369
  %v1532 = vpop.f32.mrf.mxu0
  %v1533 = vadd.f32 %v69, %v1532
  %1534 = vmatmul.f32.gmra.mxu0 %v1372
  %v1535 = vpop.f32.mrf.mxu0
  %v1536 = vadd.f32 %v69, %v1535
  %1537 = vmatmul.f32.gmra.mxu0 %v1375
  %v1538 = vpop.f32.mrf.mxu0
  %v1539 = vadd.f32 %v69, %v1538
  %1540 = vmatmul.f32.gmra.mxu0 %v1378
  %v1541 = vpop.f32.mrf.mxu0
  %v1542 = vadd.f32 %v69, %v1541
  %1543 = vmatmul.f32.gmra.mxu0 %v1381
  %v1544 = vpop.f32.mrf.mxu0
  %v1545 = vadd.f32 %v69, %v1544
  %1546 = vmatmul.f32.gmra.mxu0 %v1384
  %v1547 = vpop.f32.mrf.mxu0
  %v1548 = vadd.f32 %v69, %v1547
  %1549 = vmatmul.f32.gmra.mxu0 %v1387
  %v1550 = vpop.f32.mrf.mxu0
  %v1551 = vadd.f32 %v69, %v1550
  %1552 = vmatmul.f32.gmra.mxu0 %v1390
  %v1553 = vpop.f32.mrf.mxu0
  %v1554 = vadd.f32 %v69, %v1553
  %1555 = vmatmul.f32.gmra.mxu0 %v1393
  %v1556 = vpop.f32.mrf.mxu0
  %v1557 = vadd.f32 %v69, %v1556
  %1558 = vmatmul.f32.gmra.mxu0 %v1396
  %v1559 = vpop.f32.mrf.mxu0
  %v1560 = vadd.f32 %v69, %v1559
  %1561 = vmatmul.f32.gmra.mxu0 %v1399
  %v1562 = vpop.f32.mrf.mxu0
  %v1563 = vadd.f32 %v69, %v1562
  %1564 = vmatmul.f32.gmra.mxu0 %v1402
  %v1565 = vpop.f32.mrf.mxu0
  %v1566 = vadd.f32 %v69, %v1565
  %1567 = vdwg.mxu0
  %v1568 = vmax.f32 %v1158, %v1422
  %v1569 = vmax.f32 %v1159, %v1425
  %v1570 = vmax.f32 %v1160, %v1428
  %v1571 = vmax.f32 %v1161, %v1431
  %v1572 = vmax.f32 %v1162, %v1434
  %v1573 = vmax.f32 %v1163, %v1437
  %v1574 = vmax.f32 %v1164, %v1440
  %v1575 = vmax.f32 %v1165, %v1443
  %v1576 = vmax.f32 %v1166, %v1446
  %v1577 = vmax.f32 %v1167, %v1449
  %v1578 = vmax.f32 %v1168, %v1452
  %v1579 = vmax.f32 %v1169, %v1455
  %v1580 = vmax.f32 %v1170, %v1458
  %v1581 = vmax.f32 %v1171, %v1461
  %v1582 = vmax.f32 %v1172, %v1464
  %v1583 = vmax.f32 %v1173, %v1467
  %v1584 = vmax.f32 %v1174, %v1470
  %v1585 = vmax.f32 %v1175, %v1473
  %v1586 = vmax.f32 %v1176, %v1476
  %v1587 = vmax.f32 %v1177, %v1479
  %v1588 = vmax.f32 %v1178, %v1482
  %v1589 = vmax.f32 %v1179, %v1485
  %v1590 = vmax.f32 %v1180, %v1488
  %v1591 = vmax.f32 %v1181, %v1491
  %v1592 = vmax.f32 %v1182, %v1494
  %v1593 = vmax.f32 %v1183, %v1497
  %v1594 = vmax.f32 %v1184, %v1500
  %v1595 = vmax.f32 %v1185, %v1503
  %v1596 = vmax.f32 %v1186, %v1506
  %v1597 = vmax.f32 %v1187, %v1509
  %v1598 = vmax.f32 %v1188, %v1512
  %v1599 = vmax.f32 %v1189, %v1515
  %v1600 = vmax.f32 %v1190, %v1518
  %v1601 = vmax.f32 %v1191, %v1521
  %v1602 = vmax.f32 %v1192, %v1524
  %v1603 = vmax.f32 %v1193, %v1527
  %v1604 = vmax.f32 %v1194, %v1530
  %v1605 = vmax.f32 %v1195, %v1533
  %v1606 = vmax.f32 %v1196, %v1536
  %v1607 = vmax.f32 %v1197, %v1539
  %v1608 = vmax.f32 %v1198, %v1542
  %v1609 = vmax.f32 %v1199, %v1545
  %v1610 = vmax.f32 %v1200, %v1548
  %v1611 = vmax.f32 %v1201, %v1551
  %v1612 = vmax.f32 %v1202, %v1554
  %v1613 = vmax.f32 %v1203, %v1557
  %v1614 = vmax.f32 %v1204, %v1560
  %v1615 = vmax.f32 %v1205, %v1563
  %v1616 = vmax.f32 %v1206, %v1566
  %v1617 = vmax.f32 %v1568, 0.0
  %v1618 = vmax.f32 %v1569, 0.0
  %v1619 = vmax.f32 %v1570, 0.0
  %v1620 = vmax.f32 %v1571, 0.0
  %v1621 = vmax.f32 %v1572, 0.0
  %v1622 = vmax.f32 %v1573, 0.0
  %v1623 = vmax.f32 %v1574, 0.0
  %v1624 = vmax.f32 %v1575, 0.0
  %v1625 = vmax.f32 %v1576, 0.0
  %v1626 = vmax.f32 %v1577, 0.0
  %v1627 = vmax.f32 %v1578, 0.0
  %v1628 = vmax.f32 %v1579, 0.0
  %v1629 = vmax.f32 %v1580, 0.0
  %v1630 = vmax.f32 %v1581, 0.0
  %v1631 = vmax.f32 %v1582, 0.0
  %v1632 = vmax.f32 %v1583, 0.0
  %v1633 = vmax.f32 %v1584, 0.0
  %v1634 = vmax.f32 %v1585, 0.0
  %v1635 = vmax.f32 %v1586, 0.0
  %v1636 = vmax.f32 %v1587, 0.0
  %v1637 = vmax.f32 %v1588, 0.0
  %v1638 = vmax.f32 %v1589, 0.0
  %v1639 = vmax.f32 %v1590, 0.0
  %v1640 = vmax.f32 %v1591, 0.0
  %v1641 = vmax.f32 %v1592, 0.0
  %v1642 = vmax.f32 %v1593, 0.0
  %v1643 = vmax.f32 %v1594, 0.0
  %v1644 = vmax.f32 %v1595, 0.0
  %v1645 = vmax.f32 %v1596, 0.0
  %v1646 = vmax.f32 %v1597, 0.0
  %v1647 = vmax.f32 %v1598, 0.0
  %v1648 = vmax.f32 %v1599, 0.0
  %v1649 = vmax.f32 %v1600, 0.0
  %v1650 = vmax.f32 %v1601, 0.0
  %v1651 = vmax.f32 %v1602, 0.0
  %v1652 = vmax.f32 %v1603, 0.0
  %v1653 = vmax.f32 %v1604, 0.0
  %v1654 = vmax.f32 %v1605, 0.0
  %v1655 = vmax.f32 %v1606, 0.0
  %v1656 = vmax.f32 %v1607, 0.0
  %v1657 = vmax.f32 %v1608, 0.0
  %v1658 = vmax.f32 %v1609, 0.0
  %v1659 = vmax.f32 %v1610, 0.0
  %v1660 = vmax.f32 %v1611, 0.0
  %v1661 = vmax.f32 %v1612, 0.0
  %v1662 = vmax.f32 %v1613, 0.0
  %v1663 = vmax.f32 %v1614, 0.0
  %v1664 = vmax.f32 %v1615, 0.0
  %v1665 = vmax.f32 %v1616, 0.0
  %1666 = vst [vmem:[%s3] sm:$0xff] %v1617
  %1667 = vst [vmem:[%s3 + $0x8] sm:$0xff] %v1618
  %1668 = vst [vmem:[%s3 + $0x10] sm:$0xff] %v1619
  %1669 = vst [vmem:[%s3 + $0x18] sm:$0xff] %v1620
  %1670 = vst [vmem:[%s3 + $0x20] sm:$0xff] %v1621
  %1671 = vst [vmem:[%s3 + $0x28] sm:$0xff] %v1622
  %1672 = vst [vmem:[%s3 + $0x30] sm:$0xff] %v1623
  %1673 = vst [vmem:[%s3 + $0x38] sm:$0xff] %v1624
  %1674 = vst [vmem:[%s3 + $0x40] sm:$0xff] %v1625
  %1675 = vst [vmem:[%s3 + $0x48] sm:$0xff] %v1626
  %1676 = vst [vmem:[%s3 + $0x50] sm:$0xff] %v1627
  %1677 = vst [vmem:[%s3 + $0x58] sm:$0xff] %v1628
  %1678 = vst [vmem:[%s3 + $0x60] sm:$0xff] %v1629
  %1679 = vst [vmem:[%s3 + $0x68] sm:$0xff] %v1630
  %1680 = vst [vmem:[%s3 + $0x70] sm:$0xff] %v1631
  %1681 = vst [vmem:[%s3 + $0x78] sm:$0xff] %v1632
  %1682 = vst [vmem:[%s3 + $0x80] sm:$0xff] %v1633
  %1683 = vst [vmem:[%s3 + $0x88] sm:$0xff] %v1634
  %1684 = vst [vmem:[%s3 + $0x90] sm:$0xff] %v1635
  %1685 = vst [vmem:[%s3 + $0x98] sm:$0xff] %v1636
  %1686 = vst [vmem:[%s3 + $0xa0] sm:$0xff] %v1637
  %1687 = vst [vmem:[%s3 + $0xa8] sm:$0xff] %v1638
  %1688 = vst [vmem:[%s3 + $0xb0] sm:$0xff] %v1639
  %1689 = vst [vmem:[%s3 + $0xb8] sm:$0xff] %v1640
  %1690 = vst [vmem:[%s3 + $0xc0] sm:$0xff] %v1641
  %1691 = vst [vmem:[%s3 + $0xc8] sm:$0xff] %v1642
  %1692 = vst [vmem:[%s3 + $0xd0] sm:$0xff] %v1643
  %1693 = vst [vmem:[%s3 + $0xd8] sm:$0xff] %v1644
  %1694 = vst [vmem:[%s3 + $0xe0] sm:$0xff] %v1645
  %1695 = vst [vmem:[%s3 + $0xe8] sm:$0xff] %v1646
  %1696 = vst [vmem:[%s3 + $0xf0] sm:$0xff] %v1647
  %1697 = vst [vmem:[%s3 + $0xf8] sm:$0xff] %v1648
  %1698 = vst [vmem:[%s3 + $0x100] sm:$0xff] %v1649
  %1699 = vst [vmem:[%s3 + $0x108] sm:$0xff] %v1650
  %1700 = vst [vmem:[%s3 + $0x110] sm:$0xff] %v1651
  %1701 = vst [vmem:[%s3 + $0x118] sm:$0xff] %v1652
  %1702 = vst [vmem:[%s3 + $0x120] sm:$0xff] %v1653
  %1703 = vst [vmem:[%s3 + $0x128] sm:$0xff] %v1654
  %1704 = vst [vmem:[%s3 + $0x130] sm:$0xff] %v1655
  %1705 = vst [vmem:[%s3 + $0x138] sm:$0xff] %v1656
  %1706 = vst [vmem:[%s3 + $0x140] sm:$0xff] %v1657
  %1707 = vst [vmem:[%s3 + $0x148] sm:$0xff] %v1658
  %1708 = vst [vmem:[%s3 + $0x150] sm:$0xff] %v1659
  %1709 = vst [vmem:[%s3 + $0x158] sm:$0xff] %v1660
  %1710 = vst [vmem:[%s3 + $0x160] sm:$0xff] %v1661
  %1711 = vst [vmem:[%s3 + $0x168] sm:$0xff] %v1662
  %1712 = vst [vmem:[%s3 + $0x170] sm:$0xff] %v1663
  %1713 = vst [vmem:[%s3 + $0x178] sm:$0xff] %v1664
  %1714 = vst [vmem:[%s3 + $0x180] sm:$0xff] %v1665
  // Predicated region
  $region14: #{lenet5_forward.3} parent=0 // pred_check
    _
  $region15: #{lenet5_forward.3} parent=0 // pred_check_branch
    %1716 = sbr.rel (0) target = $region17
  $region16: #{lenet5_forward.3} parent=0 // pred_region
    _
  $region17: #{lenet5_forward.3} parent=0 // pred_fallthru
    _
  // Predicated region
  $region18: #{lenet5_forward.3} parent=0 // pred_check
    _
  $region19: #{lenet5_forward.3} parent=0 // pred_check_branch
    %1718 = sbr.rel (0) target = $region21
  $region20: #{lenet5_forward.3} parent=0 // pred_region
    _
  $region21: #{lenet5_forward.3} parent=0 // pred_fallthru
    _

// kernel: lenet5_forward.4
$region0: #{lenet5_forward.4}
  #allocation0 [shape = 'u32[]', space=smem, size = 0x4, offset = 0x4, fixed_abs, tag = 'smem constant byte address 0x4 - core index']
  #allocation1 [shape = 'u32[72,128]{1,0:T(1,128)}', space=vmem, size = 0x9000, scoped, tag = 'internal scratch']
  %s0 = inlined_call_operand.vmem [shape: f32[4,50,150], index: 0, kind: input, shape index: {}]
  %s1 = inlined_call_operand.vmem [shape: f32[150,128], index: 1, kind: input, shape index: {}]
  %s2 = inlined_call_operand.vmem [shape: f32[1,128], index: 2, kind: input, shape index: {}]
  %s3 = inlined_call_operand.vmem [shape: f32[50,128], index: 3, kind: output, shape index: {}]
  %s4 = sld [smem:[#allocation0]]
  $region22: #{lenet5_forward.4} parent=0
    _
  %s6 = ssub.s32 1, %s4
  %s7 = scalar_select 0, %s6, %s4
  // Predicated region
  $region2: #{lenet5_forward.4} parent=0 // pred_check
    _
  $region3: #{lenet5_forward.4} parent=0 // pred_check_branch
    %9 = sbr.rel (0) target = $region5
  $region4: #{lenet5_forward.4} parent=0 // pred_region
    _
  $region5: #{lenet5_forward.4} parent=0 // pred_fallthru
    _
  // Predicated region
  $region6: #{lenet5_forward.4} parent=0 // pred_check
    _
  $region7: #{lenet5_forward.4} parent=0 // pred_check_branch
    %11 = sbr.rel (0) target = $region9
  $region8: #{lenet5_forward.4} parent=0 // pred_region
    _
  $region9: #{lenet5_forward.4} parent=0 // pred_fallthru
    _
  // Predicated region
  $region10: #{lenet5_forward.4} parent=0 // pred_check
    _
  $region11: #{lenet5_forward.4} parent=0 // pred_check_branch
    %13 = sbr.rel (0) target = $region13
  $region12: #{lenet5_forward.4} parent=0 // pred_region
    _
  $region13: #{lenet5_forward.4} parent=0 // pred_fallthru
    _
  %v14 = vld [vmem:[%s1] sm:$0xff]
  %v15 = vld [vmem:[%s1 + $0x8] sm:$0xff]
  %v16 = vld [vmem:[%s1 + $0x10] sm:$0xff]
  %v17 = vld [vmem:[%s1 + $0x18] sm:$0xff]
  %v18 = vld [vmem:[%s1 + $0x20] sm:$0xff]
  %v19 = vld [vmem:[%s1 + $0x28] sm:$0xff]
  %v20 = vld [vmem:[%s1 + $0x30] sm:$0xff]
  %v21 = vld [vmem:[%s1 + $0x38] sm:$0xff]
  %v22 = vld [vmem:[%s1 + $0x40] sm:$0xff]
  %v23 = vld [vmem:[%s1 + $0x48] sm:$0xff]
  %v24 = vld [vmem:[%s1 + $0x50] sm:$0xff]
  %v25 = vld [vmem:[%s1 + $0x58] sm:$0xff]
  %v26 = vld [vmem:[%s1 + $0x60] sm:$0xff]
  %v27 = vld [vmem:[%s1 + $0x68] sm:$0xff]
  %v28 = vld [vmem:[%s1 + $0x70] sm:$0xff]
  %v29 = vld [vmem:[%s1 + $0x78] sm:$0xff]
  %v30 = vld [vmem:[%s1 + $0x80] sm:$0xff]
  %v31 = vld [vmem:[%s1 + $0x88] sm:$0xff]
  %v32 = vld [vmem:[%s1 + $0x90] sm:$0x3f]
  %v33 = vld [vmem:[%s2] sm:$0x1]
  %v34 = vld [vmem:[%s0] sm:$0xff]
  %v35 = vld [vmem:[%s0 + $0x8] sm:$0xff]
  %v36 = vld [vmem:[%s0 + $0x10] sm:$0xff]
  %v37 = vld [vmem:[%s0 + $0x18] sm:$0xff]
  %v38 = vld [vmem:[%s0 + $0x20] sm:$0xff]
  %v39 = vld [vmem:[%s0 + $0x28] sm:$0xff]
  %v40 = vld [vmem:[%s0 + $0x30] sm:$0xff]
  %v41 = vld [vmem:[%s0 + $0x38] sm:$0xff]
  %v42 = vld [vmem:[%s0 + $0x40] sm:$0xff]
  %v43 = vld [vmem:[%s0 + $0x48] sm:$0xff]
  %v44 = vld [vmem:[%s0 + $0x50] sm:$0xff]
  %v45 = vld [vmem:[%s0 + $0x58] sm:$0xff]
  %v46 = vld [vmem:[%s0 + $0x60] sm:$0x3]
  %v47 = vld [vmem:[%s0 + $0x68] sm:$0x3]
  %v49 = vperm.slane %v33, 0
  %vm51 = vcmask 179200
  %v53 = vsel %vm51, %v35, 0
  %v56 = vsel %vm51, %v37, 0
  %v59 = vsel %vm51, %v39, 0
  %v62 = vsel %vm51, %v41, 0
  %v65 = vsel %vm51, %v43, 0
  %v68 = vsel %vm51, %v45, 0
  %v71 = vsel %vm51, %v47, 0
  %vm73 = vcmask 1045504
  %v75 = vsel %vm73, %v32, 0
  %77 = vmatpush.msra.mxu0 %v29
  %78 = vmatpush.msra.mxu0 %v28
  %79 = vmatpush.msra.mxu0 %v27
  %80 = vmatpush.msra.mxu0 %v26
  %81 = vmatpush.msra.mxu0 %v25
  %82 = vmatpush.msra.mxu0 %v24
  %83 = vmatpush.msra.mxu0 %v23
  %84 = vmatpush.msra.mxu0 %v22
  %85 = vmatpush.msra.mxu0 %v21
  %86 = vmatpush.msra.mxu0 %v20
  %87 = vmatpush.msra.mxu0 %v19
  %88 = vmatpush.msra.mxu0 %v18
  %89 = vmatpush.msra.mxu0 %v17
  %90 = vmatpush.msra.mxu0 %v16
  %91 = vmatpush.msra.mxu0 %v15
  %92 = vmatpush.msra.mxu0 %v14
  %93 = vmatmul.f32.gmra.mxu0 %v34
  %v94 = vpop.f32.mrf.mxu0
  %v95 = vadd.f32 %v49, %v94
  %96 = vmatmul.f32.gmra.mxu0 %v36
  %v97 = vpop.f32.mrf.mxu0
  %v98 = vadd.f32 %v49, %v97
  %99 = vmatmul.f32.gmra.mxu0 %v38
  %v100 = vpop.f32.mrf.mxu0
  %v101 = vadd.f32 %v49, %v100
  %102 = vmatmul.f32.gmra.mxu0 %v40
  %v103 = vpop.f32.mrf.mxu0
  %v104 = vadd.f32 %v49, %v103
  %105 = vmatmul.f32.gmra.mxu0 %v42
  %v106 = vpop.f32.mrf.mxu0
  %v107 = vadd.f32 %v49, %v106
  %108 = vmatmul.f32.gmra.mxu0 %v44
  %v109 = vpop.f32.mrf.mxu0
  %v110 = vadd.f32 %v49, %v109
  %111 = vmatmul.f32.gmra.mxu0 %v46
  %v112 = vpop.f32.mrf.mxu0
  %v113 = vadd.f32 %v49, %v112
  %114 = vdwg.mxu0
  %115 = vmatpush.msra.mxu0 0.0
  %116 = vmatpush.msra.mxu0 0.0
  %117 = vmatpush.msra.mxu0 0.0
  %118 = vmatpush.msra.mxu0 0.0
  %119 = vmatpush.msra.mxu0 0.0
  %120 = vmatpush.msra.mxu0 0.0
  %121 = vmatpush.msra.mxu0 0.0
  %122 = vmatpush.msra.mxu0 0.0
  %123 = vmatpush.msra.mxu0 0.0
  %124 = vmatpush.msra.mxu0 0.0
  %125 = vmatpush.msra.mxu0 0.0
  %126 = vmatpush.msra.mxu0 0.0
  %127 = vmatpush.msra.mxu0 0.0
  %128 = vmatpush.msra.mxu0 %v75
  %129 = vmatpush.msra.mxu0 %v31
  %130 = vmatpush.msra.mxu0 %v30
  %131 = vmatmul.f32.gmra.mxu0 %v53
  %v132 = vpop.f32.mrf.mxu0
  %v133 = vadd.f32 %v95, %v132
  %134 = vmatmul.f32.gmra.mxu0 %v56
  %v135 = vpop.f32.mrf.mxu0
  %v136 = vadd.f32 %v98, %v135
  %137 = vmatmul.f32.gmra.mxu0 %v59
  %v138 = vpop.f32.mrf.mxu0
  %v139 = vadd.f32 %v101, %v138
  %140 = vmatmul.f32.gmra.mxu0 %v62
  %v141 = vpop.f32.mrf.mxu0
  %v142 = vadd.f32 %v104, %v141
  %143 = vmatmul.f32.gmra.mxu0 %v65
  %v144 = vpop.f32.mrf.mxu0
  %v145 = vadd.f32 %v107, %v144
  %146 = vmatmul.f32.gmra.mxu0 %v68
  %v147 = vpop.f32.mrf.mxu0
  %v148 = vadd.f32 %v110, %v147
  %149 = vmatmul.f32.gmra.mxu0 %v71
  %v150 = vpop.f32.mrf.mxu0
  %v151 = vadd.f32 %v113, %v150
  %152 = vdwg.mxu0
  %s153 = scalar_lea.vmem %s0, 112
  %v154 = vld [vmem:[%s153] sm:$0xff]
  %v155 = vld [vmem:[%s153 + $0x8] sm:$0xff]
  %v156 = vld [vmem:[%s153 + $0x10] sm:$0xff]
  %v157 = vld [vmem:[%s153 + $0x18] sm:$0xff]
  %v158 = vld [vmem:[%s153 + $0x20] sm:$0xff]
  %v159 = vld [vmem:[%s153 + $0x28] sm:$0xff]
  %v160 = vld [vmem:[%s153 + $0x30] sm:$0xff]
  %v161 = vld [vmem:[%s153 + $0x38] sm:$0xff]
  %v162 = vld [vmem:[%s153 + $0x40] sm:$0xff]
  %v163 = vld [vmem:[%s153 + $0x48] sm:$0xff]
  %v164 = vld [vmem:[%s153 + $0x50] sm:$0xff]
  %v165 = vld [vmem:[%s153 + $0x58] sm:$0xff]
  %v166 = vld [vmem:[%s153 + $0x60] sm:$0x3]
  %v167 = vld [vmem:[%s153 + $0x68] sm:$0x3]
  %v169 = vsel %vm51, %v155, 0
  %v172 = vsel %vm51, %v157, 0
  %v175 = vsel %vm51, %v159, 0
  %v178 = vsel %vm51, %v161, 0
  %v181 = vsel %vm51, %v163, 0
  %v184 = vsel %vm51, %v165, 0
  %v187 = vsel %vm51, %v167, 0
  %189 = vmatpush.msra.mxu0 %v29
  %190 = vmatpush.msra.mxu0 %v28
  %191 = vmatpush.msra.mxu0 %v27
  %192 = vmatpush.msra.mxu0 %v26
  %193 = vmatpush.msra.mxu0 %v25
  %194 = vmatpush.msra.mxu0 %v24
  %195 = vmatpush.msra.mxu0 %v23
  %196 = vmatpush.msra.mxu0 %v22
  %197 = vmatpush.msra.mxu0 %v21
  %198 = vmatpush.msra.mxu0 %v20
  %199 = vmatpush.msra.mxu0 %v19
  %200 = vmatpush.msra.mxu0 %v18
  %201 = vmatpush.msra.mxu0 %v17
  %202 = vmatpush.msra.mxu0 %v16
  %203 = vmatpush.msra.mxu0 %v15
  %204 = vmatpush.msra.mxu0 %v14
  %205 = vmatmul.f32.gmra.mxu0 %v154
  %v206 = vpop.f32.mrf.mxu0
  %v207 = vadd.f32 %v49, %v206
  %208 = vmatmul.f32.gmra.mxu0 %v156
  %v209 = vpop.f32.mrf.mxu0
  %v210 = vadd.f32 %v49, %v209
  %211 = vmatmul.f32.gmra.mxu0 %v158
  %v212 = vpop.f32.mrf.mxu0
  %v213 = vadd.f32 %v49, %v212
  %214 = vmatmul.f32.gmra.mxu0 %v160
  %v215 = vpop.f32.mrf.mxu0
  %v216 = vadd.f32 %v49, %v215
  %217 = vmatmul.f32.gmra.mxu0 %v162
  %v218 = vpop.f32.mrf.mxu0
  %v219 = vadd.f32 %v49, %v218
  %220 = vmatmul.f32.gmra.mxu0 %v164
  %v221 = vpop.f32.mrf.mxu0
  %v222 = vadd.f32 %v49, %v221
  %223 = vmatmul.f32.gmra.mxu0 %v166
  %v224 = vpop.f32.mrf.mxu0
  %v225 = vadd.f32 %v49, %v224
  %226 = vdwg.mxu0
  %227 = vmatpush.msra.mxu0 0.0
  %228 = vmatpush.msra.mxu0 0.0
  %229 = vmatpush.msra.mxu0 0.0
  %230 = vmatpush.msra.mxu0 0.0
  %231 = vmatpush.msra.mxu0 0.0
  %232 = vmatpush.msra.mxu0 0.0
  %233 = vmatpush.msra.mxu0 0.0
  %234 = vmatpush.msra.mxu0 0.0
  %235 = vmatpush.msra.mxu0 0.0
  %236 = vmatpush.msra.mxu0 0.0
  %237 = vmatpush.msra.mxu0 0.0
  %238 = vmatpush.msra.mxu0 0.0
  %239 = vmatpush.msra.mxu0 0.0
  %240 = vmatpush.msra.mxu0 %v75
  %241 = vmatpush.msra.mxu0 %v31
  %242 = vmatpush.msra.mxu0 %v30
  %243 = vmatmul.f32.gmra.mxu0 %v169
  %v244 = vpop.f32.mrf.mxu0
  %v245 = vadd.f32 %v207, %v244
  %246 = vmatmul.f32.gmra.mxu0 %v172
  %v247 = vpop.f32.mrf.mxu0
  %v248 = vadd.f32 %v210, %v247
  %249 = vmatmul.f32.gmra.mxu0 %v175
  %v250 = vpop.f32.mrf.mxu0
  %v251 = vadd.f32 %v213, %v250
  %252 = vmatmul.f32.gmra.mxu0 %v178
  %v253 = vpop.f32.mrf.mxu0
  %v254 = vadd.f32 %v216, %v253
  %255 = vmatmul.f32.gmra.mxu0 %v181
  %v256 = vpop.f32.mrf.mxu0
  %v257 = vadd.f32 %v219, %v256
  %258 = vmatmul.f32.gmra.mxu0 %v184
  %v259 = vpop.f32.mrf.mxu0
  %v260 = vadd.f32 %v222, %v259
  %261 = vmatmul.f32.gmra.mxu0 %v187
  %v262 = vpop.f32.mrf.mxu0
  %v263 = vadd.f32 %v225, %v262
  %264 = vdwg.mxu0
  %v265 = vmax.f32 %v133, %v245
  %v266 = vmax.f32 %v136, %v248
  %v267 = vmax.f32 %v139, %v251
  %v268 = vmax.f32 %v142, %v254
  %v269 = vmax.f32 %v145, %v257
  %v270 = vmax.f32 %v148, %v260
  %v271 = vmax.f32 %v151, %v263
  %s272 = scalar_lea.vmem %s0, 224
  %v273 = vld [vmem:[%s272] sm:$0xff]
  %v274 = vld [vmem:[%s272 + $0x8] sm:$0xff]
  %v275 = vld [vmem:[%s272 + $0x10] sm:$0xff]
  %v276 = vld [vmem:[%s272 + $0x18] sm:$0xff]
  %v277 = vld [vmem:[%s272 + $0x20] sm:$0xff]
  %v278 = vld [vmem:[%s272 + $0x28] sm:$0xff]
  %v279 = vld [vmem:[%s272 + $0x30] sm:$0xff]
  %v280 = vld [vmem:[%s272 + $0x38] sm:$0xff]
  %v281 = vld [vmem:[%s272 + $0x40] sm:$0xff]
  %v282 = vld [vmem:[%s272 + $0x48] sm:$0xff]
  %v283 = vld [vmem:[%s272 + $0x50] sm:$0xff]
  %v284 = vld [vmem:[%s272 + $0x58] sm:$0xff]
  %v285 = vld [vmem:[%s272 + $0x60] sm:$0x3]
  %v286 = vld [vmem:[%s272 + $0x68] sm:$0x3]
  %v288 = vsel %vm51, %v274, 0
  %v291 = vsel %vm51, %v276, 0
  %v294 = vsel %vm51, %v278, 0
  %v297 = vsel %vm51, %v280, 0
  %v300 = vsel %vm51, %v282, 0
  %v303 = vsel %vm51, %v284, 0
  %v306 = vsel %vm51, %v286, 0
  %308 = vmatpush.msra.mxu0 %v29
  %309 = vmatpush.msra.mxu0 %v28
  %310 = vmatpush.msra.mxu0 %v27
  %311 = vmatpush.msra.mxu0 %v26
  %312 = vmatpush.msra.mxu0 %v25
  %313 = vmatpush.msra.mxu0 %v24
  %314 = vmatpush.msra.mxu0 %v23
  %315 = vmatpush.msra.mxu0 %v22
  %316 = vmatpush.msra.mxu0 %v21
  %317 = vmatpush.msra.mxu0 %v20
  %318 = vmatpush.msra.mxu0 %v19
  %319 = vmatpush.msra.mxu0 %v18
  %320 = vmatpush.msra.mxu0 %v17
  %321 = vmatpush.msra.mxu0 %v16
  %322 = vmatpush.msra.mxu0 %v15
  %323 = vmatpush.msra.mxu0 %v14
  %324 = vmatmul.f32.gmra.mxu0 %v273
  %v325 = vpop.f32.mrf.mxu0
  %v326 = vadd.f32 %v49, %v325
  %327 = vmatmul.f32.gmra.mxu0 %v275
  %v328 = vpop.f32.mrf.mxu0
  %v329 = vadd.f32 %v49, %v328
  %330 = vmatmul.f32.gmra.mxu0 %v277
  %v331 = vpop.f32.mrf.mxu0
  %v332 = vadd.f32 %v49, %v331
  %333 = vmatmul.f32.gmra.mxu0 %v279
  %v334 = vpop.f32.mrf.mxu0
  %v335 = vadd.f32 %v49, %v334
  %336 = vmatmul.f32.gmra.mxu0 %v281
  %v337 = vpop.f32.mrf.mxu0
  %v338 = vadd.f32 %v49, %v337
  %339 = vmatmul.f32.gmra.mxu0 %v283
  %v340 = vpop.f32.mrf.mxu0
  %v341 = vadd.f32 %v49, %v340
  %342 = vmatmul.f32.gmra.mxu0 %v285
  %v343 = vpop.f32.mrf.mxu0
  %v344 = vadd.f32 %v49, %v343
  %345 = vdwg.mxu0
  %346 = vmatpush.msra.mxu0 0.0
  %347 = vmatpush.msra.mxu0 0.0
  %348 = vmatpush.msra.mxu0 0.0
  %349 = vmatpush.msra.mxu0 0.0
  %350 = vmatpush.msra.mxu0 0.0
  %351 = vmatpush.msra.mxu0 0.0
  %352 = vmatpush.msra.mxu0 0.0
  %353 = vmatpush.msra.mxu0 0.0
  %354 = vmatpush.msra.mxu0 0.0
  %355 = vmatpush.msra.mxu0 0.0
  %356 = vmatpush.msra.mxu0 0.0
  %357 = vmatpush.msra.mxu0 0.0
  %358 = vmatpush.msra.mxu0 0.0
  %359 = vmatpush.msra.mxu0 %v75
  %360 = vmatpush.msra.mxu0 %v31
  %361 = vmatpush.msra.mxu0 %v30
  %362 = vmatmul.f32.gmra.mxu0 %v288
  %v363 = vpop.f32.mrf.mxu0
  %v364 = vadd.f32 %v326, %v363
  %365 = vmatmul.f32.gmra.mxu0 %v291
  %v366 = vpop.f32.mrf.mxu0
  %v367 = vadd.f32 %v329, %v366
  %368 = vmatmul.f32.gmra.mxu0 %v294
  %v369 = vpop.f32.mrf.mxu0
  %v370 = vadd.f32 %v332, %v369
  %371 = vmatmul.f32.gmra.mxu0 %v297
  %v372 = vpop.f32.mrf.mxu0
  %v373 = vadd.f32 %v335, %v372
  %374 = vmatmul.f32.gmra.mxu0 %v300
  %v375 = vpop.f32.mrf.mxu0
  %v376 = vadd.f32 %v338, %v375
  %377 = vmatmul.f32.gmra.mxu0 %v303
  %v378 = vpop.f32.mrf.mxu0
  %v379 = vadd.f32 %v341, %v378
  %380 = vmatmul.f32.gmra.mxu0 %v306
  %v381 = vpop.f32.mrf.mxu0
  %v382 = vadd.f32 %v344, %v381
  %383 = vdwg.mxu0
  %v384 = vmax.f32 %v265, %v364
  %v385 = vmax.f32 %v266, %v367
  %v386 = vmax.f32 %v267, %v370
  %v387 = vmax.f32 %v268, %v373
  %v388 = vmax.f32 %v269, %v376
  %v389 = vmax.f32 %v270, %v379
  %v390 = vmax.f32 %v271, %v382
  %s391 = scalar_lea.vmem %s0, 336
  %v392 = vld [vmem:[%s391] sm:$0xff]
  %v393 = vld [vmem:[%s391 + $0x8] sm:$0xff]
  %v394 = vld [vmem:[%s391 + $0x10] sm:$0xff]
  %v395 = vld [vmem:[%s391 + $0x18] sm:$0xff]
  %v396 = vld [vmem:[%s391 + $0x20] sm:$0xff]
  %v397 = vld [vmem:[%s391 + $0x28] sm:$0xff]
  %v398 = vld [vmem:[%s391 + $0x30] sm:$0xff]
  %v399 = vld [vmem:[%s391 + $0x38] sm:$0xff]
  %v400 = vld [vmem:[%s391 + $0x40] sm:$0xff]
  %v401 = vld [vmem:[%s391 + $0x48] sm:$0xff]
  %v402 = vld [vmem:[%s391 + $0x50] sm:$0xff]
  %v403 = vld [vmem:[%s391 + $0x58] sm:$0xff]
  %v404 = vld [vmem:[%s391 + $0x60] sm:$0x3]
  %v405 = vld [vmem:[%s391 + $0x68] sm:$0x3]
  %v407 = vsel %vm51, %v393, 0
  %v410 = vsel %vm51, %v395, 0
  %v413 = vsel %vm51, %v397, 0
  %v416 = vsel %vm51, %v399, 0
  %v419 = vsel %vm51, %v401, 0
  %v422 = vsel %vm51, %v403, 0
  %v425 = vsel %vm51, %v405, 0
  %427 = vmatpush.msra.mxu0 %v29
  %428 = vmatpush.msra.mxu0 %v28
  %429 = vmatpush.msra.mxu0 %v27
  %430 = vmatpush.msra.mxu0 %v26
  %431 = vmatpush.msra.mxu0 %v25
  %432 = vmatpush.msra.mxu0 %v24
  %433 = vmatpush.msra.mxu0 %v23
  %434 = vmatpush.msra.mxu0 %v22
  %435 = vmatpush.msra.mxu0 %v21
  %436 = vmatpush.msra.mxu0 %v20
  %437 = vmatpush.msra.mxu0 %v19
  %438 = vmatpush.msra.mxu0 %v18
  %439 = vmatpush.msra.mxu0 %v17
  %440 = vmatpush.msra.mxu0 %v16
  %441 = vmatpush.msra.mxu0 %v15
  %442 = vmatpush.msra.mxu0 %v14
  %443 = vmatmul.f32.gmra.mxu0 %v392
  %v444 = vpop.f32.mrf.mxu0
  %v445 = vadd.f32 %v49, %v444
  %446 = vmatmul.f32.gmra.mxu0 %v394
  %v447 = vpop.f32.mrf.mxu0
  %v448 = vadd.f32 %v49, %v447
  %449 = vmatmul.f32.gmra.mxu0 %v396
  %v450 = vpop.f32.mrf.mxu0
  %v451 = vadd.f32 %v49, %v450
  %452 = vmatmul.f32.gmra.mxu0 %v398
  %v453 = vpop.f32.mrf.mxu0
  %v454 = vadd.f32 %v49, %v453
  %455 = vmatmul.f32.gmra.mxu0 %v400
  %v456 = vpop.f32.mrf.mxu0
  %v457 = vadd.f32 %v49, %v456
  %458 = vmatmul.f32.gmra.mxu0 %v402
  %v459 = vpop.f32.mrf.mxu0
  %v460 = vadd.f32 %v49, %v459
  %461 = vmatmul.f32.gmra.mxu0 %v404
  %v462 = vpop.f32.mrf.mxu0
  %v463 = vadd.f32 %v49, %v462
  %464 = vdwg.mxu0
  %465 = vmatpush.msra.mxu0 0.0
  %466 = vmatpush.msra.mxu0 0.0
  %467 = vmatpush.msra.mxu0 0.0
  %468 = vmatpush.msra.mxu0 0.0
  %469 = vmatpush.msra.mxu0 0.0
  %470 = vmatpush.msra.mxu0 0.0
  %471 = vmatpush.msra.mxu0 0.0
  %472 = vmatpush.msra.mxu0 0.0
  %473 = vmatpush.msra.mxu0 0.0
  %474 = vmatpush.msra.mxu0 0.0
  %475 = vmatpush.msra.mxu0 0.0
  %476 = vmatpush.msra.mxu0 0.0
  %477 = vmatpush.msra.mxu0 0.0
  %478 = vmatpush.msra.mxu0 %v75
  %479 = vmatpush.msra.mxu0 %v31
  %480 = vmatpush.msra.mxu0 %v30
  %481 = vmatmul.f32.gmra.mxu0 %v407
  %v482 = vpop.f32.mrf.mxu0
  %v483 = vadd.f32 %v445, %v482
  %484 = vmatmul.f32.gmra.mxu0 %v410
  %v485 = vpop.f32.mrf.mxu0
  %v486 = vadd.f32 %v448, %v485
  %487 = vmatmul.f32.gmra.mxu0 %v413
  %v488 = vpop.f32.mrf.mxu0
  %v489 = vadd.f32 %v451, %v488
  %490 = vmatmul.f32.gmra.mxu0 %v416
  %v491 = vpop.f32.mrf.mxu0
  %v492 = vadd.f32 %v454, %v491
  %493 = vmatmul.f32.gmra.mxu0 %v419
  %v494 = vpop.f32.mrf.mxu0
  %v495 = vadd.f32 %v457, %v494
  %496 = vmatmul.f32.gmra.mxu0 %v422
  %v497 = vpop.f32.mrf.mxu0
  %v498 = vadd.f32 %v460, %v497
  %499 = vmatmul.f32.gmra.mxu0 %v425
  %v500 = vpop.f32.mrf.mxu0
  %v501 = vadd.f32 %v463, %v500
  %502 = vdwg.mxu0
  %v503 = vmax.f32 %v384, %v483
  %v504 = vmax.f32 %v385, %v486
  %v505 = vmax.f32 %v386, %v489
  %v506 = vmax.f32 %v387, %v492
  %v507 = vmax.f32 %v388, %v495
  %v508 = vmax.f32 %v389, %v498
  %v509 = vmax.f32 %v390, %v501
  %v510 = vmax.f32 %v503, 0.0
  %v511 = vmax.f32 %v504, 0.0
  %v512 = vmax.f32 %v505, 0.0
  %v513 = vmax.f32 %v506, 0.0
  %v514 = vmax.f32 %v507, 0.0
  %v515 = vmax.f32 %v508, 0.0
  %v516 = vmax.f32 %v509, 0.0
  %517 = vst [vmem:[%s3] sm:$0xff] %v510
  %518 = vst [vmem:[%s3 + $0x8] sm:$0xff] %v511
  %519 = vst [vmem:[%s3 + $0x10] sm:$0xff] %v512
  %520 = vst [vmem:[%s3 + $0x18] sm:$0xff] %v513
  %521 = vst [vmem:[%s3 + $0x20] sm:$0xff] %v514
  %522 = vst [vmem:[%s3 + $0x28] sm:$0xff] %v515
  %523 = vst [vmem:[%s3 + $0x30] sm:$0x3] %v516
  // Predicated region
  $region14: #{lenet5_forward.4} parent=0 // pred_check
    _
  $region15: #{lenet5_forward.4} parent=0 // pred_check_branch
    %525 = sbr.rel (0) target = $region17
  $region16: #{lenet5_forward.4} parent=0 // pred_region
    _
  $region17: #{lenet5_forward.4} parent=0 // pred_fallthru
    _
  // Predicated region
  $region18: #{lenet5_forward.4} parent=0 // pred_check
    _
  $region19: #{lenet5_forward.4} parent=0 // pred_check_branch
    %527 = sbr.rel (0) target = $region21
  $region20: #{lenet5_forward.4} parent=0 // pred_region
    _
  $region21: #{lenet5_forward.4} parent=0 // pred_fallthru
    _

// kernel: lenet5_forward.5
$region0: #{lenet5_forward.5}
  #allocation0 [shape = 'u32[]', space=smem, size = 0x4, offset = 0x4, fixed_abs, tag = 'smem constant byte address 0x4 - core index']
  #allocation1 [shape = 'u32[72,128]{1,0:T(1,128)}', space=vmem, size = 0x9000, scoped, tag = 'internal scratch']
  %s0 = inlined_call_operand.vmem [shape: f32[2,400], index: 0, kind: input, shape index: {}]
  %s1 = inlined_call_operand.vmem [shape: f32[400,128], index: 1, kind: input, shape index: {}]
  %s2 = inlined_call_operand.vmem [shape: f32[1,128], index: 2, kind: input, shape index: {}]
  %s3 = inlined_call_operand.vmem [shape: f32[128,128], index: 3, kind: input, shape index: {}]
  %s4 = inlined_call_operand.vmem [shape: f32[1,128], index: 4, kind: input, shape index: {}]
  %s5 = inlined_call_operand.vmem [shape: f32[128,128], index: 5, kind: input, shape index: {}]
  %s6 = inlined_call_operand.vmem [shape: f32[1,128], index: 6, kind: input, shape index: {}]
  %s7 = inlined_call_operand.hbm [shape: f32[2,128], index: 7, kind: output, shape index: {}]
  %s8 = sld [smem:[#allocation0]]
  $region38: #{lenet5_forward.5} parent=0
    _
  %s10 = ssub.s32 1, %s8
  %s11 = scalar_select 0, %s10, %s8
  $region1: #{lenet5_forward.5} parent=0
    #allocation2 [shape = 'u8[1024]{0}', space=vmem, size = 0x400, scoped, tag = 'output window, operand 0, single buffered']
    #allocation3 [shape = 's32[1]{0}', space=sflag, size = 0x4, scoped, tag = 'scoped memory for lenet5_forward.5']
    %12 = vsyncpa [#allocation3], 0
    // Predicated region
    $region2: #{lenet5_forward.5} parent=1 // pred_check
      _
    $region3: #{lenet5_forward.5} parent=1 // pred_check_branch
      %14 = sbr.rel (0) target = $region5
    $region4: #{lenet5_forward.5} parent=1 // pred_region
      _
    $region5: #{lenet5_forward.5} parent=1 // pred_fallthru
      _
    // Predicated region
    $region6: #{lenet5_forward.5} parent=1 // pred_check
      _
    $region7: #{lenet5_forward.5} parent=1 // pred_check_branch
      %16 = sbr.rel (0) target = $region9
    $region8: #{lenet5_forward.5} parent=1 // pred_region
      _
    $region9: #{lenet5_forward.5} parent=1 // pred_fallthru
      _
    // Predicated region
    $region10: #{lenet5_forward.5} parent=1 // pred_check
      _
    $region11: #{lenet5_forward.5} parent=1 // pred_check_branch
      %18 = sbr.rel (0) target = $region13
    $region12: #{lenet5_forward.5} parent=1 // pred_region
      _
    $region13: #{lenet5_forward.5} parent=1 // pred_fallthru
      _
    // Predicated region
    $region14: #{lenet5_forward.5} parent=1 // pred_check
      _
    $region15: #{lenet5_forward.5} parent=1 // pred_check_branch
      %20 = sbr.rel (0) target = $region17
    $region16: #{lenet5_forward.5} parent=1 // pred_region
      _
    $region17: #{lenet5_forward.5} parent=1 // pred_fallthru
      _
    // Predicated region
    $region18: #{lenet5_forward.5} parent=1 // pred_check
      _
    $region19: #{lenet5_forward.5} parent=1 // pred_check_branch
      %22 = sbr.rel (0) target = $region21
    $region20: #{lenet5_forward.5} parent=1 // pred_region
      _
    $region21: #{lenet5_forward.5} parent=1 // pred_fallthru
      _
    // Predicated region
    $region22: #{lenet5_forward.5} parent=1 // pred_check
      _
    $region23: #{lenet5_forward.5} parent=1 // pred_check_branch
      %24 = sbr.rel (0) target = $region25
    $region24: #{lenet5_forward.5} parent=1 // pred_region
      _
    $region25: #{lenet5_forward.5} parent=1 // pred_fallthru
      _
    // Predicated region
    $region26: #{lenet5_forward.5} parent=1 // pred_check
      _
    $region27: #{lenet5_forward.5} parent=1 // pred_check_branch
      %26 = sbr.rel (0) target = $region29
    $region28: #{lenet5_forward.5} parent=1 // pred_region
      _
    $region29: #{lenet5_forward.5} parent=1 // pred_fallthru
      _
    %v27 = vld [vmem:[%s0] sm:$0xff]
    %v28 = vld [vmem:[%s1] sm:$0xff]
    %v29 = vld [vmem:[%s1 + $0x8] sm:$0xff]
    %v30 = vld [vmem:[%s1 + $0x10] sm:$0xff]
    %v31 = vld [vmem:[%s1 + $0x18] sm:$0xff]
    %v32 = vld [vmem:[%s1 + $0x20] sm:$0xff]
    %v33 = vld [vmem:[%s1 + $0x28] sm:$0xff]
    %v34 = vld [vmem:[%s1 + $0x30] sm:$0xff]
    %v35 = vld [vmem:[%s1 + $0x38] sm:$0xff]
    %v36 = vld [vmem:[%s1 + $0x40] sm:$0xff]
    %v37 = vld [vmem:[%s1 + $0x48] sm:$0xff]
    %v38 = vld [vmem:[%s1 + $0x50] sm:$0xff]
    %v39 = vld [vmem:[%s1 + $0x58] sm:$0xff]
    %v40 = vld [vmem:[%s1 + $0x60] sm:$0xff]
    %v41 = vld [vmem:[%s1 + $0x68] sm:$0xff]
    %v42 = vld [vmem:[%s1 + $0x70] sm:$0xff]
    %v43 = vld [vmem:[%s1 + $0x78] sm:$0xff]
    %v44 = vld [vmem:[%s1 + $0x80] sm:$0xff]
    %v45 = vld [vmem:[%s1 + $0x88] sm:$0xff]
    %v46 = vld [vmem:[%s1 + $0x90] sm:$0xff]
    %v47 = vld [vmem:[%s1 + $0x98] sm:$0xff]
    %v48 = vld [vmem:[%s1 + $0xa0] sm:$0xff]
    %v49 = vld [vmem:[%s1 + $0xa8] sm:$0xff]
    %v50 = vld [vmem:[%s1 + $0xb0] sm:$0xff]
    %v51 = vld [vmem:[%s1 + $0xb8] sm:$0xff]
    %v52 = vld [vmem:[%s1 + $0xc0] sm:$0xff]
    %v53 = vld [vmem:[%s1 + $0xc8] sm:$0xff]
    %v54 = vld [vmem:[%s1 + $0xd0] sm:$0xff]
    %v55 = vld [vmem:[%s1 + $0xd8] sm:$0xff]
    %v56 = vld [vmem:[%s1 + $0xe0] sm:$0xff]
    %v57 = vld [vmem:[%s1 + $0xe8] sm:$0xff]
    %v58 = vld [vmem:[%s1 + $0xf0] sm:$0xff]
    %v59 = vld [vmem:[%s1 + $0xf8] sm:$0xff]
    %v60 = vld [vmem:[%s1 + $0x100] sm:$0xff]
    %v61 = vld [vmem:[%s1 + $0x108] sm:$0xff]
    %v62 = vld [vmem:[%s1 + $0x110] sm:$0xff]
    %v63 = vld [vmem:[%s1 + $0x118] sm:$0xff]
    %v64 = vld [vmem:[%s1 + $0x120] sm:$0xff]
    %v65 = vld [vmem:[%s1 + $0x128] sm:$0xff]
    %v66 = vld [vmem:[%s1 + $0x130] sm:$0xff]
    %v67 = vld [vmem:[%s1 + $0x138] sm:$0xff]
    %v68 = vld [vmem:[%s1 + $0x140] sm:$0xff]
    %v69 = vld [vmem:[%s1 + $0x148] sm:$0xff]
    %v70 = vld [vmem:[%s1 + $0x150] sm:$0xff]
    %v71 = vld [vmem:[%s1 + $0x158] sm:$0xff]
    %v72 = vld [vmem:[%s1 + $0x160] sm:$0xff]
    %v73 = vld [vmem:[%s1 + $0x168] sm:$0xff]
    %v74 = vld [vmem:[%s1 + $0x170] sm:$0xff]
    %v75 = vld [vmem:[%s1 + $0x178] sm:$0xff]
    %v76 = vld [vmem:[%s1 + $0x180] sm:$0xff]
    %v77 = vld [vmem:[%s1 + $0x188] sm:$0xff]
    %v78 = vld [vmem:[%s2] sm:$0x1]
    %v80 = vperm.slane %v78, 0
    %83 = vst [vmem:[#allocation1] ss:$4 sm:$0xff] %v27
    %v84 = vld.sshfl [vmem:[#allocation1] sm:$0xff pattern:$0x73625140]
    %v85 = vld.sshfl [vmem:[#allocation1 + $0x8] sm:$0xff pattern:$0x73625140]
    %v86 = vld.sshfl [vmem:[#allocation1 + $0x10] sm:$0xff pattern:$0x73625140]
    %v87 = vld.sshfl [vmem:[#allocation1 + $0x18] sm:$0xff pattern:$0x73625140]
    %vm91 = vcmask 130048
    %v92 = vsel %vm91, %v87, 0
    %94 = vmatpush.msra.mxu0 %v43
    %95 = vmatpush.msra.mxu0 %v42
    %96 = vmatpush.msra.mxu0 %v41
    %97 = vmatpush.msra.mxu0 %v40
    %98 = vmatpush.msra.mxu0 %v39
    %99 = vmatpush.msra.mxu0 %v38
    %100 = vmatpush.msra.mxu0 %v37
    %101 = vmatpush.msra.mxu0 %v36
    %102 = vmatpush.msra.mxu0 %v35
    %103 = vmatpush.msra.mxu0 %v34
    %104 = vmatpush.msra.mxu0 %v33
    %105 = vmatpush.msra.mxu0 %v32
    %106 = vmatpush.msra.mxu0 %v31
    %107 = vmatpush.msra.mxu0 %v30
    %108 = vmatpush.msra.mxu0 %v29
    %109 = vmatpush.msra.mxu0 %v28
    %110 = vmatmul.f32.gmra.mxu0 %v84
    %v111 = vpop.f32.mrf.mxu0
    %v112 = vadd.f32 %v80, %v111
    %113 = vdwg.mxu0
    %114 = vmatpush.msra.mxu0 %v59
    %115 = vmatpush.msra.mxu0 %v58
    %116 = vmatpush.msra.mxu0 %v57
    %117 = vmatpush.msra.mxu0 %v56
    %118 = vmatpush.msra.mxu0 %v55
    %119 = vmatpush.msra.mxu0 %v54
    %120 = vmatpush.msra.mxu0 %v53
    %121 = vmatpush.msra.mxu0 %v52
    %122 = vmatpush.msra.mxu0 %v51
    %123 = vmatpush.msra.mxu0 %v50
    %124 = vmatpush.msra.mxu0 %v49
    %125 = vmatpush.msra.mxu0 %v48
    %126 = vmatpush.msra.mxu0 %v47
    %127 = vmatpush.msra.mxu0 %v46
    %128 = vmatpush.msra.mxu0 %v45
    %129 = vmatpush.msra.mxu0 %v44
    %130 = vmatmul.f32.gmra.mxu0 %v85
    %v131 = vpop.f32.mrf.mxu0
    %v132 = vadd.f32 %v112, %v131
    %133 = vdwg.mxu0
    %134 = vmatpush.msra.mxu0 %v75
    %135 = vmatpush.msra.mxu0 %v74
    %136 = vmatpush.msra.mxu0 %v73
    %137 = vmatpush.msra.mxu0 %v72
    %138 = vmatpush.msra.mxu0 %v71
    %139 = vmatpush.msra.mxu0 %v70
    %140 = vmatpush.msra.mxu0 %v69
    %141 = vmatpush.msra.mxu0 %v68
    %142 = vmatpush.msra.mxu0 %v67
    %143 = vmatpush.msra.mxu0 %v66
    %144 = vmatpush.msra.mxu0 %v65
    %145 = vmatpush.msra.mxu0 %v64
    %146 = vmatpush.msra.mxu0 %v63
    %147 = vmatpush.msra.mxu0 %v62
    %148 = vmatpush.msra.mxu0 %v61
    %149 = vmatpush.msra.mxu0 %v60
    %150 = vmatmul.f32.gmra.mxu0 %v86
    %v151 = vpop.f32.mrf.mxu0
    %v152 = vadd.f32 %v132, %v151
    %153 = vdwg.mxu0
    %154 = vmatpush.msra.mxu0 0.0
    %155 = vmatpush.msra.mxu0 0.0
    %156 = vmatpush.msra.mxu0 0.0
    %157 = vmatpush.msra.mxu0 0.0
    %158 = vmatpush.msra.mxu0 0.0
    %159 = vmatpush.msra.mxu0 0.0
    %160 = vmatpush.msra.mxu0 0.0
    %161 = vmatpush.msra.mxu0 0.0
    %162 = vmatpush.msra.mxu0 0.0
    %163 = vmatpush.msra.mxu0 0.0
    %164 = vmatpush.msra.mxu0 0.0
    %165 = vmatpush.msra.mxu0 0.0
    %166 = vmatpush.msra.mxu0 0.0
    %167 = vmatpush.msra.mxu0 0.0
    %168 = vmatpush.msra.mxu0 %v77
    %169 = vmatpush.msra.mxu0 %v76
    %170 = vmatmul.f32.gmra.mxu0 %v92
    %v171 = vpop.f32.mrf.mxu0
    %v172 = vadd.f32 %v152, %v171
    %173 = vdwg.mxu0
    %v174 = vmax.f32 %v172, 0.0
    %v175 = vld [vmem:[%s3] sm:$0xff]
    %v176 = vld [vmem:[%s3 + $0x8] sm:$0xff]
    %v177 = vld [vmem:[%s3 + $0x10] sm:$0xff]
    %v178 = vld [vmem:[%s3 + $0x18] sm:$0xff]
    %v179 = vld [vmem:[%s3 + $0x20] sm:$0xff]
    %v180 = vld [vmem:[%s3 + $0x28] sm:$0xff]
    %v181 = vld [vmem:[%s3 + $0x30] sm:$0xff]
    %v182 = vld [vmem:[%s3 + $0x38] sm:$0xff]
    %v183 = vld [vmem:[%s3 + $0x40] sm:$0xff]
    %v184 = vld [vmem:[%s3 + $0x48] sm:$0xff]
    %v185 = vld [vmem:[%s3 + $0x50] sm:$0xff]
    %v186 = vld [vmem:[%s3 + $0x58] sm:$0xff]
    %v187 = vld [vmem:[%s3 + $0x60] sm:$0xff]
    %v188 = vld [vmem:[%s3 + $0x68] sm:$0xff]
    %v189 = vld [vmem:[%s3 + $0x70] sm:$0xff]
    %v190 = vld [vmem:[%s3 + $0x78] sm:$0xff]
    %v191 = vld [vmem:[%s4] sm:$0x1]
    %v193 = vperm.slane %v191, 0
    %195 = vmatpush.msra.mxu0 %v190
    %196 = vmatpush.msra.mxu0 %v189
    %197 = vmatpush.msra.mxu0 %v188
    %198 = vmatpush.msra.mxu0 %v187
    %199 = vmatpush.msra.mxu0 %v186
    %200 = vmatpush.msra.mxu0 %v185
    %201 = vmatpush.msra.mxu0 %v184
    %202 = vmatpush.msra.mxu0 %v183
    %203 = vmatpush.msra.mxu0 %v182
    %204 = vmatpush.msra.mxu0 %v181
    %205 = vmatpush.msra.mxu0 %v180
    %206 = vmatpush.msra.mxu0 %v179
    %207 = vmatpush.msra.mxu0 %v178
    %208 = vmatpush.msra.mxu0 %v177
    %209 = vmatpush.msra.mxu0 %v176
    %210 = vmatpush.msra.mxu0 %v175
    %211 = vmatmul.f32.gmra.mxu0 %v174
    %v212 = vpop.f32.mrf.mxu0
    %v213 = vadd.f32 %v193, %v212
    %214 = vdwg.mxu0
    %v215 = vmax.f32 %v213, 0.0
    %v216 = vld [vmem:[%s5] sm:$0xff]
    %v217 = vld [vmem:[%s5 + $0x8] sm:$0xff]
    %v218 = vld [vmem:[%s5 + $0x10] sm:$0xff]
    %v219 = vld [vmem:[%s5 + $0x18] sm:$0xff]
    %v220 = vld [vmem:[%s5 + $0x20] sm:$0xff]
    %v221 = vld [vmem:[%s5 + $0x28] sm:$0xff]
    %v222 = vld [vmem:[%s5 + $0x30] sm:$0xff]
    %v223 = vld [vmem:[%s5 + $0x38] sm:$0xff]
    %v224 = vld [vmem:[%s5 + $0x40] sm:$0xff]
    %v225 = vld [vmem:[%s5 + $0x48] sm:$0xff]
    %v226 = vld [vmem:[%s5 + $0x50] sm:$0xff]
    %v227 = vld [vmem:[%s5 + $0x58] sm:$0xff]
    %v228 = vld [vmem:[%s5 + $0x60] sm:$0xff]
    %v229 = vld [vmem:[%s5 + $0x68] sm:$0xff]
    %v230 = vld [vmem:[%s5 + $0x70] sm:$0xff]
    %v231 = vld [vmem:[%s5 + $0x78] sm:$0xff]
    %v232 = vld [vmem:[%s6] sm:$0x1]
    %v234 = vperm.slane %v232, 0
    %236 = vmatpush.msra.mxu0 %v231
    %237 = vmatpush.msra.mxu0 %v230
    %238 = vmatpush.msra.mxu0 %v229
    %239 = vmatpush.msra.mxu0 %v228
    %240 = vmatpush.msra.mxu0 %v227
    %241 = vmatpush.msra.mxu0 %v226
    %242 = vmatpush.msra.mxu0 %v225
    %243 = vmatpush.msra.mxu0 %v224
    %244 = vmatpush.msra.mxu0 %v223
    %245 = vmatpush.msra.mxu0 %v222
    %246 = vmatpush.msra.mxu0 %v221
    %247 = vmatpush.msra.mxu0 %v220
    %248 = vmatpush.msra.mxu0 %v219
    %249 = vmatpush.msra.mxu0 %v218
    %250 = vmatpush.msra.mxu0 %v217
    %251 = vmatpush.msra.mxu0 %v216
    %252 = vmatmul.f32.gmra.mxu0 %v215
    %v253 = vpop.f32.mrf.mxu0
    %v254 = vadd.f32 %v234, %v253
    %255 = vdwg.mxu0
    %256 = vst [vmem:[#allocation2] sm:$0x3] %v254
    // Predicated region
    $region30: #{lenet5_forward.5} parent=1 // pred_check
      _
    $region31: #{lenet5_forward.5} parent=1 // pred_check_branch
      %258 = sbr.rel (0) target = $region33
    $region32: #{lenet5_forward.5} parent=1 // pred_region
      %260 = vsyncadd [#allocation3], 0
      %s262 = sshll.u32 [#allocation2], 4
      %s263 = int_to_ptr.vmem [resolvable:$true] %s262
      %s264 = sshll.u32 %s7, 4
      %s265 = int_to_ptr.hbm [resolvable:$true] %s264
      %267 = dma.vmem_to_hbm [thread:$0]  %s263, 32, %s265, [#allocation3]
    $region33: #{lenet5_forward.5} parent=1 // pred_fallthru
      _
    // Predicated region
    $region34: #{lenet5_forward.5} parent=1 // pred_check
      _
    $region35: #{lenet5_forward.5} parent=1 // pred_check_branch
      %269 = sbr.rel (0) target = $region37
    $region36: #{lenet5_forward.5} parent=1 // pred_region
      %271 = dma.done [#allocation3], 32
    $region37: #{lenet5_forward.5} parent=1 // pred_fallthru
      _
    %272 = vsyncpa [#allocation3], 1

</llo_original>
